<compile_context>
chip_gen: v6e
topology: v6e:2x2x1
jax: 0.10.0
libtpu: 0.0.40
codegen_flags: <defaults>
</compile_context>

<pallas_src>
import numpy as np
import jax
import jax.numpy as jnp
from jax import lax
from jax.experimental import pallas as pl
from jax.experimental.pallas import tpu as pltpu


LANE = 128
ACT_DTYPE = jnp.bfloat16        # inter-stage activation / MXU-operand dtype
TILE_L = 1024                   # vertex-axis tile (v7x-safe; v6e could use 4096)
TILE_F = 2048                   # fc reduction-axis tile


def _round_up(x, m):
    return (x + m - 1) // m * m


def _nbytes(dtype):
    return jnp.dtype(dtype).itemsize


def _mosaic_params(sems, block_bytes):
    # Explicit scoped-VMEM sizing from the chosen blocks (2x for double
    # buffering + headroom), never below the 32 MiB default and clamped under
    # the smallest-VMEM chip (v7x, 64 MiB physical).
    need = 2 * int(block_bytes) + (8 << 20)
    limit = int(min(max(need, 32 << 20), 56 << 20))
    return pltpu.CompilerParams(dimension_semantics=sems, vmem_limit_bytes=limit)


# ----------------------------- Pallas kernels -----------------------------

def conv1x1_relu_kernel(x_ref, w_ref, b_ref, o_ref):
    # x_ref: (1, Cin, TL)  w_ref: (Cout, Cin)  b_ref: (Cout, 1) f32
    # bf16 (or f32) MXU operands, f32 accumulate, f32 bias+ReLU epilogue.
    x = x_ref[0]                                                  # (Cin, TL)
    y = jnp.dot(w_ref[...], x, preferred_element_type=jnp.float32)
    y = jnp.maximum(y + b_ref[...], 0.0)
    o_ref[0] = y.astype(o_ref.dtype)


def pool7_conv1x1_relu_kernel(x_ref, w_ref, b_ref, o_ref):
    # x_ref: (1, 7*C, TN) with row index k*C + c.  MaxPool1d(k=7, s=7) over the
    # gathered neighbours via 7 contiguous 64-row sublane slices, then 1x1 conv
    # + ReLU.  Epilogue in f32.
    C = w_ref.shape[1]
    x = x_ref[0]                                                  # (7*C, TN)
    pooled = x[0:C, :]
    for k in range(1, 7):
        pooled = jnp.maximum(pooled, x[k * C:(k + 1) * C, :])     # (C, TN)
    y = jnp.dot(w_ref[...], pooled, preferred_element_type=jnp.float32)
    y = jnp.maximum(y + b_ref[...], 0.0)
    o_ref[0] = y.astype(o_ref.dtype)


def linear_acc_kernel(x_ref, w_ref, b_ref, o_ref, acc_ref):
    # F-reduction pipeline.  x_ref: (B, TF), w_ref: (O, TF) torch layout
    # (F stays on the lane axis for both operands), acc_ref: (B, O) f32.
    k = pl.program_id(0)

    @pl.when(k == 0)
    def _():
        acc_ref[...] = jnp.zeros_like(acc_ref)

    x = x_ref[...].astype(jnp.float32)
    w = w_ref[...].astype(jnp.float32)
    acc_ref[...] += lax.dot_general(
        x, w, (((1,), (1,)), ((), ())), preferred_element_type=jnp.float32)

    @pl.when(k == pl.num_programs(0) - 1)
    def _():
        o_ref[...] = (acc_ref[...] + b_ref[...]).astype(o_ref.dtype)


# ----------------------------- wrappers -----------------------------

def conv1x1_relu(x, w, b, *, tile_l=TILE_L, out_dtype=None):
    """Conv1d(kernel=1) + ReLU in NCL layout, tiling the vertex (lane) axis."""
    B, Cin, L = x.shape
    Cout = w.shape[0]
    out_dtype = out_dtype or x.dtype
    b2d = b.astype(jnp.float32).reshape(Cout, 1)

    tl = min(tile_l, _round_up(L, LANE))
    Lp = _round_up(L, tl)
    if Lp != L:
        x = jnp.pad(x, ((0, 0), (0, 0), (0, Lp - L)))

    blk_bytes = (Cin * tl * _nbytes(x.dtype)
                 + Cout * tl * _nbytes(out_dtype)
                 + Cout * Cin * _nbytes(w.dtype) + Cout * 4)

    out = pl.pallas_call(
        conv1x1_relu_kernel,
        out_shape=jax.ShapeDtypeStruct((B, Cout, Lp), out_dtype),
        grid=(B, Lp // tl),
        in_specs=[
            pl.BlockSpec((1, Cin, tl), lambda bi, li: (bi, 0, li)),
            pl.BlockSpec((Cout, Cin), lambda bi, li: (0, 0)),
            pl.BlockSpec((Cout, 1), lambda bi, li: (0, 0)),
        ],
        out_specs=pl.BlockSpec((1, Cout, tl), lambda bi, li: (bi, 0, li)),
        compiler_params=_mosaic_params(("parallel", "parallel"), blk_bytes),
    )(x, w, b2d)
    return out[:, :, :L] if Lp != L else out


def pool7_conv1x1_relu(x, w, b, *, tile_n=TILE_L, out_dtype=None):
    """MaxPool1d(k=7,s=7) over gathered neighbours + Conv1d(k=1) + ReLU.

    x: (B, 7*C, Nc) with row index k*C + c (k = neighbour slot, c = channel).
    """
    B, KC, Nc = x.shape
    Cout, C = w.shape
    assert KC == 7 * C
    out_dtype = out_dtype or x.dtype
    b2d = b.astype(jnp.float32).reshape(Cout, 1)

    tn = min(tile_n, _round_up(Nc, LANE))
    Np = _round_up(Nc, tn)
    if Np != Nc:
        x = jnp.pad(x, ((0, 0), (0, 0), (0, Np - Nc)))

    blk_bytes = (KC * tn * _nbytes(x.dtype)
                 + Cout * tn * _nbytes(out_dtype)
                 + Cout * C * _nbytes(w.dtype) + Cout * 4)

    out = pl.pallas_call(
        pool7_conv1x1_relu_kernel,
        out_shape=jax.ShapeDtypeStruct((B, Cout, Np), out_dtype),
        grid=(B, Np // tn),
        in_specs=[
            pl.BlockSpec((1, KC, tn), lambda bi, ni: (bi, 0, ni)),
            pl.BlockSpec((Cout, C), lambda bi, ni: (0, 0)),
            pl.BlockSpec((Cout, 1), lambda bi, ni: (0, 0)),
        ],
        out_specs=pl.BlockSpec((1, Cout, tn), lambda bi, ni: (bi, 0, ni)),
        compiler_params=_mosaic_params(("parallel", "parallel"), blk_bytes),
    )(x, w, b2d)
    return out[:, :, :Nc] if Np != Nc else out


def linear_fc(x, w, b, *, tile_f=TILE_F):
    """Linear layer as an F-reduction pipeline.  x: (B, F), w: (O, F) torch
    layout (kept as-is so F sits on the lane axis), b: (O,)."""
    B, F = x.shape
    O = w.shape[0]

    tf = min(tile_f, _round_up(F, LANE))
    Fp = _round_up(F, tf)
    if Fp != F:
        x = jnp.pad(x, ((0, 0), (0, Fp - F)))
        w = jnp.pad(w, ((0, 0), (0, Fp - F)))

    blk_bytes = (B * tf * _nbytes(x.dtype) + O * tf * _nbytes(w.dtype)
                 + 2 * B * O * 4 + O * 4)

    return pl.pallas_call(
        linear_acc_kernel,
        out_shape=jax.ShapeDtypeStruct((B, O), jnp.float32),
        grid=(Fp // tf,),
        in_specs=[
            pl.BlockSpec((B, tf), lambda k: (0, k)),
            pl.BlockSpec((O, tf), lambda k: (0, k)),
            pl.BlockSpec((1, O), lambda k: (0, 0)),
        ],
        out_specs=pl.BlockSpec((B, O), lambda k: (0, 0)),
        scratch_shapes=[pltpu.VMEM((B, O), jnp.float32)],
        compiler_params=_mosaic_params(("arbitrary",), blk_bytes),
    )(x, w, b.astype(jnp.float32).reshape(1, O))


# ----------------------------- neighbour table -----------------------------

def my_get_neighs_order_synthetic(n_vert):
    # Synthetic deterministic stand-in for adj_mat_order_6.npy on disk:
    # (n_vert, 6) 1-based neighbour indices, post-processed exactly like the
    # reference my_get_neighs_order.
    offs = np.arange(1, 7)
    adj_mat_order = ((np.arange(n_vert)[:, None] + offs[None, :]) % n_vert) + 1
    neigh_orders = np.zeros((len(adj_mat_order), 7))
    neigh_orders[:, 0:6] = adj_mat_order - 1
    neigh_orders[:, 6] = np.arange(len(adj_mat_order))
    return np.ravel(neigh_orders).astype(np.int64)


# ----------------------------- forward pass -----------------------------

def conv_with_nebs_forward(x, params, nebs, n_coarse, *, act_dtype=ACT_DTYPE):
    B = x.shape[0]
    n_fine = nebs.shape[0] // 7

    # bf16 at the HBM / MXU boundary; biases, accumulation and epilogues in f32.
    w1 = params["w1"].astype(act_dtype)
    w2r = params["w2"].reshape(64, 64 * 7).astype(act_dtype)   # (Cout, Cin*K), k-fastest
    w3 = params["w3"].astype(act_dtype)

    # conv1 (1x1) + ReLU
    x2 = conv1x1_relu(x.astype(act_dtype), w1, params["b1"])          # (B, 64, L) bf16

    # x2[:, :, nebs] rearranged so the kernel=7/stride=7 conv2 becomes a dense
    # matmul: gathered features laid out as (B, 64*7, n_fine) with row ci*7+k,
    # matching W2.reshape(64, 64*7).
    # TODO(synk): gather kept in plain JAX (could be fused into the conv2 kernel
    # via memory_space=pl.ANY + scalar-prefetched neighbour indices + DMA).
    idx_f = jnp.asarray(nebs.reshape(n_fine, 7).T, dtype=jnp.int32)   # (7, n_fine)
    xg = jnp.take(x2, idx_f, axis=2)                                  # (B, 64, 7, n_fine)
    xg = xg.reshape(B, 64 * 7, n_fine)

    # conv2 (k=7, s=7 over the gathered sequence) + ReLU, as a 1x1-style matmul.
    x3 = conv1x1_relu(xg, w2r, params["b2"])                          # (B, 64, n_fine) bf16

    # x3[:, :, nebs[:n_coarse*7]] gather, arranged as (B, 7*64, n_coarse) with
    # row k*64+c so the fused MaxPool(7)+conv3+ReLU kernel uses contiguous
    # sublane slices for the 7-way max.
    idx_c = jnp.asarray(nebs[: n_coarse * 7].reshape(n_coarse, 7).T,
                        dtype=jnp.int32)                              # (7, n_coarse)
    xp = jnp.take(x3, idx_c, axis=2)                                  # (B, 64, 7, n_coarse)
    xp = xp.transpose(0, 2, 1, 3).reshape(B, 7 * 64, n_coarse)        # row = k*64 + c
    x4 = pool7_conv1x1_relu(xp, w3, params["b3"])                     # (B, 128, n_coarse) bf16

    # TODO(synk): nn.Dropout treated as identity (eval mode); not modelled.

    x5 = x4.reshape(B, 128 * n_coarse)                                # row-major, as torch.reshape
    out = linear_fc(x5, params["wfc"], params["bfc"])                 # (B, out_ch) f32
    return out


# ----------------------------- main -----------------------------

if __name__ == "__main__":
    B, IN_CH, OUT_CH = 2, 4, 4
    # Small analogues of the 40962-vertex fine mesh / 10242-vertex coarse mesh.
    N_FINE, N_COARSE = 64, 16

    nebs = my_get_neighs_order_synthetic(N_FINE)

    key = jax.random.PRNGKey(0)
    keys = jax.random.split(key, 9)

    def init(k, shape, fan_in):
        return jax.random.uniform(k, shape, jnp.float32, -1.0, 1.0) / np.sqrt(fan_in)

    params = {
        "w1":  init(keys[0], (64, IN_CH), IN_CH),                      # Conv1d(in_ch, 64, k=1)
        "b1":  init(keys[1], (64,), IN_CH),
        "w2":  init(keys[2], (64, 64, 7), 64 * 7),                     # Conv1d(64, 64, k=7, s=7)
        "b2":  init(keys[3], (64,), 64 * 7),
        "w3":  init(keys[4], (128, 64), 64),                           # Conv1d(64, 128, k=1)
        "b3":  init(keys[5], (128,), 64),
        "wfc": init(keys[6], (OUT_CH, 128 * N_COARSE), 128 * N_COARSE),  # Linear, torch (O, F)
        "bfc": init(keys[7], (OUT_CH,), 128 * N_COARSE),
    }

    x = jax.random.normal(keys[8], (B, IN_CH, N_FINE), jnp.float32)

    fwd = jax.jit(lambda xx, pp: conv_with_nebs_forward(xx, pp, nebs, N_COARSE))
    out = fwd(x, params)
    jax.block_until_ready(out)
    assert out.shape == (B, OUT_CH), out.shape
    assert bool(jnp.all(jnp.isfinite(out)))
    print("KERNEL_OK")
</pallas_src>

<mosaic_0001>
module attributes {stable_mosaic.version = 11 : i64} {
  func.func @conv1x1_relu_kernel(%arg0: i32, %arg1: i32, %arg2: memref<1x4x128xbf16, #tpu.memory_space<vmem>>, %arg3: memref<64x4xbf16, #tpu.memory_space<vmem>>, %arg4: memref<64x1xf32, #tpu.memory_space<vmem>>, %arg5: memref<1x64x128xbf16, #tpu.memory_space<vmem>>) attributes {dimension_semantics = [#tpu.dimension_semantics<parallel>, #tpu.dimension_semantics<parallel>], iteration_bounds = array<i64: 2, 1>, scalar_prefetch = 0 : i64, scratch_operands = 0 : i64, tpu.core_type = #tpu.core_type<tc>, window_params = [{transform_indices = @transform_0, window_bounds = array<i64: 1, 4, 128>}, {pipeline_mode = #tpu.pipeline_mode<synchronous>, transform_indices = @transform_1, window_bounds = array<i64: 64, 4>}, {pipeline_mode = #tpu.pipeline_mode<synchronous>, transform_indices = @transform_2, window_bounds = array<i64: 64, 1>}, {transform_indices = @transform_3, window_bounds = array<i64: 1, 64, 128>}]} {
    %c0 = arith.constant 0 : index
    %c0_0 = arith.constant 0 : index
    %c0_1 = arith.constant 0 : index
    %0 = vector.load %arg2[%c0, %c0_0, %c0_1] : memref<1x4x128xbf16, #tpu.memory_space<vmem>>, vector<1x4x128xbf16>
    %1 = vector.shape_cast %0 : vector<1x4x128xbf16> to vector<4x128xbf16>
    %c0_2 = arith.constant 0 : index
    %c0_3 = arith.constant 0 : index
    %2 = vector.load %arg3[%c0_2, %c0_3] : memref<64x4xbf16, #tpu.memory_space<vmem>>, vector<64x4xbf16>
    %cst = arith.constant dense<0.000000e+00> : vector<64x128xf32>
    %3 = tpu.matmul %2, %1, %cst {dimension_numbers = #tpu.dot_dimension_numbers<[1], [0], [0], [1], [0, 0, 1, 1], [], []>} : vector<64x4xbf16>, vector<4x128xbf16>, vector<64x128xf32> -> vector<64x128xf32>
    %c0_4 = arith.constant 0 : index
    %c0_5 = arith.constant 0 : index
    %4 = vector.load %arg4[%c0_4, %c0_5] : memref<64x1xf32, #tpu.memory_space<vmem>>, vector<64x1xf32>
    %5 = vector.broadcast %4 : vector<64x1xf32> to vector<64x128xf32>
    %6 = arith.addf %3, %5 : vector<64x128xf32>
    %cst_6 = arith.constant 0.000000e+00 : f32
    %7 = vector.broadcast %cst_6 : f32 to vector<64x128xf32>
    %8 = arith.maximumf %6, %7 : vector<64x128xf32>
    %9 = arith.truncf %8 : vector<64x128xf32> to vector<64x128xbf16>
    %c0_7 = arith.constant 0 : index
    %c0_8 = arith.constant 0 : index
    %c0_9 = arith.constant 0 : index
    %10 = vector.load %arg5[%c0_7, %c0_8, %c0_9] : memref<1x64x128xbf16, #tpu.memory_space<vmem>>, vector<1x64x128xbf16>
    %11 = vector.shape_cast %10 : vector<1x64x128xbf16> to vector<64x128xbf16>
    %12 = vector.shape_cast %9 : vector<64x128xbf16> to vector<1x64x128xbf16>
    tpu.vector_store %arg5[%c0_7, %c0_8, %c0_9], %12 {strides = array<i32>} : memref<1x64x128xbf16, #tpu.memory_space<vmem>>, vector<1x64x128xbf16>,
    return
  }
  func.func @transform_0(%arg0: i32, %arg1: i32) -> (i32, i32, i32) {
    %c0_i32 = arith.constant 0 : i32
    %c0_i32_0 = arith.constant 0 : i32
    return %arg0, %c0_i32, %arg1 : i32, i32, i32
  }
  func.func @transform_1(%arg0: i32, %arg1: i32) -> (i32, i32) {
    %c0_i32 = arith.constant 0 : i32
    %c0_i32_0 = arith.constant 0 : i32
    %c0_i32_1 = arith.constant 0 : i32
    return %c0_i32, %c0_i32_0 : i32, i32
  }
  func.func @transform_2(%arg0: i32, %arg1: i32) -> (i32, i32) {
    %c0_i32 = arith.constant 0 : i32
    %c0_i32_0 = arith.constant 0 : i32
    %c0_i32_1 = arith.constant 0 : i32
    return %c0_i32, %c0_i32_0 : i32, i32
  }
  func.func @transform_3(%arg0: i32, %arg1: i32) -> (i32, i32, i32) {
    %c0_i32 = arith.constant 0 : i32
    %c0_i32_0 = arith.constant 0 : i32
    return %arg0, %c0_i32, %arg1 : i32, i32, i32
  }
}

module attributes {stable_mosaic.version = 11 : i64} {
  func.func @conv1x1_relu_kernel(%arg0: i32, %arg1: i32, %arg2: memref<1x448x128xbf16, #tpu.memory_space<vmem>>, %arg3: memref<64x448xbf16, #tpu.memory_space<vmem>>, %arg4: memref<64x1xf32, #tpu.memory_space<vmem>>, %arg5: memref<1x64x128xbf16, #tpu.memory_space<vmem>>) attributes {dimension_semantics = [#tpu.dimension_semantics<parallel>, #tpu.dimension_semantics<parallel>], iteration_bounds = array<i64: 2, 1>, scalar_prefetch = 0 : i64, scratch_operands = 0 : i64, tpu.core_type = #tpu.core_type<tc>, window_params = [{transform_indices = @transform_0, window_bounds = array<i64: 1, 448, 128>}, {pipeline_mode = #tpu.pipeline_mode<synchronous>, transform_indices = @transform_1, window_bounds = array<i64: 64, 448>}, {pipeline_mode = #tpu.pipeline_mode<synchronous>, transform_indices = @transform_2, window_bounds = array<i64: 64, 1>}, {transform_indices = @transform_3, window_bounds = array<i64: 1, 64, 128>}]} {
    %c0 = arith.constant 0 : index
    %c0_0 = arith.constant 0 : index
    %c0_1 = arith.constant 0 : index
    %0 = vector.load %arg2[%c0, %c0_0, %c0_1] : memref<1x448x128xbf16, #tpu.memory_space<vmem>>, vector<1x448x128xbf16>
    %1 = vector.shape_cast %0 : vector<1x448x128xbf16> to vector<448x128xbf16>
    %c0_2 = arith.constant 0 : index
    %c0_3 = arith.constant 0 : index
    %2 = vector.load %arg3[%c0_2, %c0_3] : memref<64x448xbf16, #tpu.memory_space<vmem>>, vector<64x448xbf16>
    %cst = arith.constant dense<0.000000e+00> : vector<64x128xf32>
    %3 = tpu.matmul %2, %1, %cst {dimension_numbers = #tpu.dot_dimension_numbers<[1], [0], [0], [1], [0, 0, 1, 1], [], []>} : vector<64x448xbf16>, vector<448x128xbf16>, vector<64x128xf32> -> vector<64x128xf32>
    %c0_4 = arith.constant 0 : index
    %c0_5 = arith.constant 0 : index
    %4 = vector.load %arg4[%c0_4, %c0_5] : memref<64x1xf32, #tpu.memory_space<vmem>>, vector<64x1xf32>
    %5 = vector.broadcast %4 : vector<64x1xf32> to vector<64x128xf32>
    %6 = arith.addf %3, %5 : vector<64x128xf32>
    %cst_6 = arith.constant 0.000000e+00 : f32
    %7 = vector.broadcast %cst_6 : f32 to vector<64x128xf32>
    %8 = arith.maximumf %6, %7 : vector<64x128xf32>
    %9 = arith.truncf %8 : vector<64x128xf32> to vector<64x128xbf16>
    %c0_7 = arith.constant 0 : index
    %c0_8 = arith.constant 0 : index
    %c0_9 = arith.constant 0 : index
    %10 = vector.load %arg5[%c0_7, %c0_8, %c0_9] : memref<1x64x128xbf16, #tpu.memory_space<vmem>>, vector<1x64x128xbf16>
    %11 = vector.shape_cast %10 : vector<1x64x128xbf16> to vector<64x128xbf16>
    %12 = vector.shape_cast %9 : vector<64x128xbf16> to vector<1x64x128xbf16>
    tpu.vector_store %arg5[%c0_7, %c0_8, %c0_9], %12 {strides = array<i32>} : memref<1x64x128xbf16, #tpu.memory_space<vmem>>, vector<1x64x128xbf16>,
    return
  }
  func.func @transform_0(%arg0: i32, %arg1: i32) -> (i32, i32, i32) {
    %c0_i32 = arith.constant 0 : i32
    %c0_i32_0 = arith.constant 0 : i32
    return %arg0, %c0_i32, %arg1 : i32, i32, i32
  }
  func.func @transform_1(%arg0: i32, %arg1: i32) -> (i32, i32) {
    %c0_i32 = arith.constant 0 : i32
    %c0_i32_0 = arith.constant 0 : i32
    %c0_i32_1 = arith.constant 0 : i32
    return %c0_i32, %c0_i32_0 : i32, i32
  }
  func.func @transform_2(%arg0: i32, %arg1: i32) -> (i32, i32) {
    %c0_i32 = arith.constant 0 : i32
    %c0_i32_0 = arith.constant 0 : i32
    %c0_i32_1 = arith.constant 0 : i32
    return %c0_i32, %c0_i32_0 : i32, i32
  }
  func.func @transform_3(%arg0: i32, %arg1: i32) -> (i32, i32, i32) {
    %c0_i32 = arith.constant 0 : i32
    %c0_i32_0 = arith.constant 0 : i32
    return %arg0, %c0_i32, %arg1 : i32, i32, i32
  }
}

module attributes {stable_mosaic.version = 11 : i64} {
  func.func @pool7_conv1x1_relu_kernel(%arg0: i32, %arg1: i32, %arg2: memref<1x448x128xbf16, #tpu.memory_space<vmem>>, %arg3: memref<128x64xbf16, #tpu.memory_space<vmem>>, %arg4: memref<128x1xf32, #tpu.memory_space<vmem>>, %arg5: memref<1x128x128xbf16, #tpu.memory_space<vmem>>) attributes {dimension_semantics = [#tpu.dimension_semantics<parallel>, #tpu.dimension_semantics<parallel>], iteration_bounds = array<i64: 2, 1>, scalar_prefetch = 0 : i64, scratch_operands = 0 : i64, tpu.core_type = #tpu.core_type<tc>, window_params = [{transform_indices = @transform_0, window_bounds = array<i64: 1, 448, 128>}, {pipeline_mode = #tpu.pipeline_mode<synchronous>, transform_indices = @transform_1, window_bounds = array<i64: 128, 64>}, {pipeline_mode = #tpu.pipeline_mode<synchronous>, transform_indices = @transform_2, window_bounds = array<i64: 128, 1>}, {transform_indices = @transform_3, window_bounds = array<i64: 1, 128, 128>}]} {
    %c0 = arith.constant 0 : index
    %c0_0 = arith.constant 0 : index
    %c0_1 = arith.constant 0 : index
    %0 = vector.load %arg2[%c0, %c0_0, %c0_1] : memref<1x448x128xbf16, #tpu.memory_space<vmem>>, vector<1x448x128xbf16>
    %1 = vector.shape_cast %0 : vector<1x448x128xbf16> to vector<448x128xbf16>
    %2 = vector.extract_strided_slice %1 {offsets = [0, 0], sizes = [64, 128], strides = [1, 1]} : vector<448x128xbf16> to vector<64x128xbf16>
    %3 = vector.extract_strided_slice %1 {offsets = [64, 0], sizes = [64, 128], strides = [1, 1]} : vector<448x128xbf16> to vector<64x128xbf16>
    %4 = arith.maximumf %2, %3 : vector<64x128xbf16>
    %5 = vector.extract_strided_slice %1 {offsets = [128, 0], sizes = [64, 128], strides = [1, 1]} : vector<448x128xbf16> to vector<64x128xbf16>
    %6 = arith.maximumf %4, %5 : vector<64x128xbf16>
    %7 = vector.extract_strided_slice %1 {offsets = [192, 0], sizes = [64, 128], strides = [1, 1]} : vector<448x128xbf16> to vector<64x128xbf16>
    %8 = arith.maximumf %6, %7 : vector<64x128xbf16>
    %9 = vector.extract_strided_slice %1 {offsets = [256, 0], sizes = [64, 128], strides = [1, 1]} : vector<448x128xbf16> to vector<64x128xbf16>
    %10 = arith.maximumf %8, %9 : vector<64x128xbf16>
    %11 = vector.extract_strided_slice %1 {offsets = [320, 0], sizes = [64, 128], strides = [1, 1]} : vector<448x128xbf16> to vector<64x128xbf16>
    %12 = arith.maximumf %10, %11 : vector<64x128xbf16>
    %13 = vector.extract_strided_slice %1 {offsets = [384, 0], sizes = [64, 128], strides = [1, 1]} : vector<448x128xbf16> to vector<64x128xbf16>
    %14 = arith.maximumf %12, %13 : vector<64x128xbf16>
    %c0_2 = arith.constant 0 : index
    %c0_3 = arith.constant 0 : index
    %15 = vector.load %arg3[%c0_2, %c0_3] : memref<128x64xbf16, #tpu.memory_space<vmem>>, vector<128x64xbf16>
    %cst = arith.constant dense<0.000000e+00> : vector<128x128xf32>
    %16 = tpu.matmul %15, %14, %cst {dimension_numbers = #tpu.dot_dimension_numbers<[1], [0], [0], [1], [0, 0, 1, 1], [], []>} : vector<128x64xbf16>, vector<64x128xbf16>, vector<128x128xf32> -> vector<128x128xf32>
    %c0_4 = arith.constant 0 : index
    %c0_5 = arith.constant 0 : index
    %17 = vector.load %arg4[%c0_4, %c0_5] : memref<128x1xf32, #tpu.memory_space<vmem>>, vector<128x1xf32>
    %18 = vector.broadcast %17 : vector<128x1xf32> to vector<128x128xf32>
    %19 = arith.addf %16, %18 : vector<128x128xf32>
    %cst_6 = arith.constant 0.000000e+00 : f32
    %20 = vector.broadcast %cst_6 : f32 to vector<128x128xf32>
    %21 = arith.maximumf %19, %20 : vector<128x128xf32>
    %22 = arith.truncf %21 : vector<128x128xf32> to vector<128x128xbf16>
    %c0_7 = arith.constant 0 : index
    %c0_8 = arith.constant 0 : index
    %c0_9 = arith.constant 0 : index
    %23 = vector.load %arg5[%c0_7, %c0_8, %c0_9] : memref<1x128x128xbf16, #tpu.memory_space<vmem>>, vector<1x128x128xbf16>
    %24 = vector.shape_cast %23 : vector<1x128x128xbf16> to vector<128x128xbf16>
    %25 = vector.shape_cast %22 : vector<128x128xbf16> to vector<1x128x128xbf16>
    tpu.vector_store %arg5[%c0_7, %c0_8, %c0_9], %25 {strides = array<i32>} : memref<1x128x128xbf16, #tpu.memory_space<vmem>>, vector<1x128x128xbf16>,
    return
  }
  func.func @transform_0(%arg0: i32, %arg1: i32) -> (i32, i32, i32) {
    %c0_i32 = arith.constant 0 : i32
    %c0_i32_0 = arith.constant 0 : i32
    return %arg0, %c0_i32, %arg1 : i32, i32, i32
  }
  func.func @transform_1(%arg0: i32, %arg1: i32) -> (i32, i32) {
    %c0_i32 = arith.constant 0 : i32
    %c0_i32_0 = arith.constant 0 : i32
    %c0_i32_1 = arith.constant 0 : i32
    return %c0_i32, %c0_i32_0 : i32, i32
  }
  func.func @transform_2(%arg0: i32, %arg1: i32) -> (i32, i32) {
    %c0_i32 = arith.constant 0 : i32
    %c0_i32_0 = arith.constant 0 : i32
    %c0_i32_1 = arith.constant 0 : i32
    return %c0_i32, %c0_i32_0 : i32, i32
  }
  func.func @transform_3(%arg0: i32, %arg1: i32) -> (i32, i32, i32) {
    %c0_i32 = arith.constant 0 : i32
    %c0_i32_0 = arith.constant 0 : i32
    return %arg0, %c0_i32, %arg1 : i32, i32, i32
  }
}

module attributes {stable_mosaic.version = 11 : i64} {
  func.func @linear_acc_kernel(%arg0: i32, %arg1: memref<2x2048xbf16, #tpu.memory_space<vmem>>, %arg2: memref<4x2048xf32, #tpu.memory_space<vmem>>, %arg3: memref<1x4xf32, #tpu.memory_space<vmem>>, %arg4: memref<2x4xf32, #tpu.memory_space<vmem>>, %arg5: memref<2x4xf32, #tpu.memory_space<vmem>>) attributes {dimension_semantics = [#tpu.dimension_semantics<arbitrary>], iteration_bounds = array<i64: 1>, scalar_prefetch = 0 : i64, scratch_operands = 1 : i64, tpu.core_type = #tpu.core_type<tc>, window_params = [{transform_indices = @transform_0, window_bounds = array<i64: 2, 2048>}, {transform_indices = @transform_1, window_bounds = array<i64: 4, 2048>}, {pipeline_mode = #tpu.pipeline_mode<synchronous>, transform_indices = @transform_2, window_bounds = array<i64: 1, 4>}, {pipeline_mode = #tpu.pipeline_mode<synchronous>, transform_indices = @transform_3, window_bounds = array<i64: 2, 4>}]} {
    %c0_i32 = arith.constant 0 : i32
    %0 = arith.cmpi eq, %arg0, %c0_i32 : i32
    %1 = arith.extui %0 : i1 to i32
    %c0_i32_0 = arith.constant 0 : i32
    %2 = arith.cmpi ne, %1, %c0_i32_0 : i32
    scf.if %2 {
      %cst_10 = arith.constant 0.000000e+00 : f32
      %13 = vector.broadcast %cst_10 : f32 to vector<2x4xf32>
      %c0_11 = arith.constant 0 : index
      %c0_12 = arith.constant 0 : index
      %14 = vector.load %arg5[%c0_11, %c0_12] : memref<2x4xf32, #tpu.memory_space<vmem>>, vector<2x4xf32>
      tpu.vector_store %arg5[%c0_11, %c0_12], %13 {strides = array<i32>} : memref<2x4xf32, #tpu.memory_space<vmem>>, vector<2x4xf32>,
    } else {
    }
    %c0 = arith.constant 0 : index
    %c0_1 = arith.constant 0 : index
    %3 = vector.load %arg1[%c0, %c0_1] : memref<2x2048xbf16, #tpu.memory_space<vmem>>, vector<2x2048xbf16>
    %4 = arith.extf %3 : vector<2x2048xbf16> to vector<2x2048xf32>
    %c0_2 = arith.constant 0 : index
    %c0_3 = arith.constant 0 : index
    %5 = vector.load %arg2[%c0_2, %c0_3] : memref<4x2048xf32, #tpu.memory_space<vmem>>, vector<4x2048xf32>
    %c0_4 = arith.constant 0 : index
    %c0_5 = arith.constant 0 : index
    %6 = vector.load %arg5[%c0_4, %c0_5] : memref<2x4xf32, #tpu.memory_space<vmem>>, vector<2x4xf32>
    %cst = arith.constant dense<0.000000e+00> : vector<2x4xf32>
    %7 = tpu.matmul %4, %5, %cst {dimension_numbers = #tpu.dot_dimension_numbers<[1], [1], [0], [0], [0, 0, 1, 0], [], []>} : vector<2x2048xf32>, vector<4x2048xf32>, vector<2x4xf32> -> vector<2x4xf32>
    %8 = arith.addf %6, %7 : vector<2x4xf32>
    %c0_6 = arith.constant 0 : index
    %c0_7 = arith.constant 0 : index
    %9 = vector.load %arg5[%c0_6, %c0_7] : memref<2x4xf32, #tpu.memory_space<vmem>>, vector<2x4xf32>
    tpu.vector_store %arg5[%c0_6, %c0_7], %8 {strides = array<i32>} : memref<2x4xf32, #tpu.memory_space<vmem>>, vector<2x4xf32>,
    %c0_i32_8 = arith.constant 0 : i32
    %10 = arith.cmpi eq, %arg0, %c0_i32_8 : i32
    %11 = arith.extui %10 : i1 to i32
    %c0_i32_9 = arith.constant 0 : i32
    %12 = arith.cmpi ne, %11, %c0_i32_9 : i32
    scf.if %12 {
      %c0_10 = arith.constant 0 : index
      %c0_11 = arith.constant 0 : index
      %13 = vector.load %arg5[%c0_10, %c0_11] : memref<2x4xf32, #tpu.memory_space<vmem>>, vector<2x4xf32>
      %c0_12 = arith.constant 0 : index
      %c0_13 = arith.constant 0 : index
      %14 = vector.load %arg3[%c0_12, %c0_13] : memref<1x4xf32, #tpu.memory_space<vmem>>, vector<1x4xf32>
      %15 = vector.broadcast %14 : vector<1x4xf32> to vector<2x4xf32>
      %16 = arith.addf %13, %15 : vector<2x4xf32>
      %c0_14 = arith.constant 0 : index
      %c0_15 = arith.constant 0 : index
      %17 = vector.load %arg4[%c0_14, %c0_15] : memref<2x4xf32, #tpu.memory_space<vmem>>, vector<2x4xf32>
      tpu.vector_store %arg4[%c0_14, %c0_15], %16 {strides = array<i32>} : memref<2x4xf32, #tpu.memory_space<vmem>>, vector<2x4xf32>,
    } else {
    }
    return
  }
  func.func @transform_0(%arg0: i32) -> (i32, i32) {
    %c0_i32 = arith.constant 0 : i32
    %c0_i32_0 = arith.constant 0 : i32
    return %c0_i32, %arg0 : i32, i32
  }
  func.func @transform_1(%arg0: i32) -> (i32, i32) {
    %c0_i32 = arith.constant 0 : i32
    %c0_i32_0 = arith.constant 0 : i32
    return %c0_i32, %arg0 : i32, i32
  }
  func.func @transform_2(%arg0: i32) -> (i32, i32) {
    %c0_i32 = arith.constant 0 : i32
    %c0_i32_0 = arith.constant 0 : i32
    %c0_i32_1 = arith.constant 0 : i32
    return %c0_i32, %c0_i32_0 : i32, i32
  }
  func.func @transform_3(%arg0: i32) -> (i32, i32) {
    %c0_i32 = arith.constant 0 : i32
    %c0_i32_0 = arith.constant 0 : i32
    %c0_i32_1 = arith.constant 0 : i32
    return %c0_i32, %c0_i32_0 : i32, i32
  }
}

</mosaic_0001>

<llo_original>
// kernel: _lambda_.4
$region0: #{_lambda_.4}
  #allocation0 [shape = 'u32[]', space=smem, size = 0x4, offset = 0x4, fixed_abs, tag = 'smem constant byte address 0x4 - core index']
  #allocation1 [shape = 'u32[144,128]{1,0:T(1,128)}', space=vmem, size = 0x12000, scoped, tag = 'internal scratch']
  %s0 = inlined_call_operand.vmem [shape: bf16[2,4,128], index: 0, kind: input, shape index: {}]
  %s1 = inlined_call_operand.vmem [shape: bf16[64,4], index: 1, kind: input, shape index: {}]
  %s2 = inlined_call_operand.vmem [shape: f32[64,1], index: 2, kind: input, shape index: {}]
  %s3 = inlined_call_operand.vmem [shape: bf16[2,64,128], index: 3, kind: output, shape index: {}]
  %s4 = sld [smem:[#allocation0]]
  $region45: #{_lambda_.4} parent=0
    _
  %s6 = ssub.s32 1, %s4
  %s7 = scalar_select 0, %s6, %s4
  loop: start=0, step=1, limit=4
  $region2: #{_lambda_.4} parent=0 // loop_pre_header
    _
  $region3: #{_lambda_.4} parent=0 // loop_header
    %s9 = sphi 0, %s13
    %p10 = scmp.ge.s32.totalorder %s9, 4
    %s16 = sphi 0, %s28
    %s17 = sphi 0, %s24
    %s18 = sphi 0, %s16
    %s19 = sphi 0, %s17
    %s20 = sphi 0, %s18
    %s21 = sphi 0, %s19
    %s33 = sphi 0, %s35
    %s36 = sphi 0, %s33
    %s37 = sphi 0, %s36
    %s53 = sphi 0, %s37
    %s57 = sphi 0, %s57
    %s59 = sphi 0, %s57
    %s60 = sphi 0, %s59
    %s74 = sphi 0, %s60
    %s78 = sphi 0, %s78
    %s80 = sphi 0, %s78
    %s81 = sphi 0, %s80
    %s95 = sphi 0, %s81
    %s103 = sphi 0, %s105
    %s106 = sphi 0, %s103
    %s107 = sphi 0, %s106
    %s123 = sphi 0, %s107
  $region4: #{_lambda_.4} parent=0 // loop_header_branch
    %12 = sbr.rel (%p10) target = $region8
  $region5: #{_lambda_.4} parent=0 // loop_body
    %s14 = ssub.s32 %s9, 1
    %s15 = ssub.s32 %s9, 2
    %s22 = sadd.s32 1, %s17
    %p23 = scmp.ge.s32.totalorder %s22, 1
    %s24 = scalar_select %p23, 0, %s22
    %s25 = sadd.s32 1, %s16
    %s26 = scalar_select %p23, %s25, %s16
    %p27 = scmp.ge.s32.totalorder %s26, 2
    %s28 = scalar_select %p27, 0, %s26
    %s29 = ssub.s32 %s16, %s28
    %s30 = ssub.s32 %s17, %s24
    %s31 = sor.u32 %s29, %s30
    %p32 = scmp.eq.s32.totalorder %s31, 0
    %s34 = sadd.s32 %s33, 1
    %s35 = scalar_select %p32, %s33, %s34
    %p38 = pneg %p32
    %p39 = scmp.eq.s32.totalorder %s9, 1
    %p40 = por %p38, %p39
    %p41 = scmp.ne.s32.totalorder %s33, %s36
    %p42 = scmp.eq.s32.totalorder %s9, 0
    %p43 = por %p41, %p42
    %p44 = scmp.ne.s32.totalorder %s33, %s36
    %p45 = scmp.eq.s32.totalorder %s14, 1
    %p46 = por %p44, %p45
    %p47 = scmp.ne.s32.totalorder %s36, %s37
    %p48 = scmp.eq.s32.totalorder %s14, 0
    %p49 = por %p47, %p48
    %p50 = scmp.ne.s32.totalorder %s36, %s37
    %p51 = scmp.eq.s32.totalorder %s15, 1
    %p52 = por %p50, %p51
    %p54 = scmp.ne.s32.totalorder %s37, %s53
    %p55 = scmp.eq.s32.totalorder %s15, 0
    %p56 = por %p54, %p55
    %s58 = sadd.s32 %s57, 1
    %p61 = scmp.eq.s32.totalorder %s9, 1
    %p62 = scmp.ne.s32.totalorder %s57, %s59
    %p63 = scmp.eq.s32.totalorder %s9, 0
    %p64 = por %p62, %p63
    %p65 = scmp.ne.s32.totalorder %s57, %s59
    %p66 = scmp.eq.s32.totalorder %s14, 1
    %p67 = por %p65, %p66
    %p68 = scmp.ne.s32.totalorder %s59, %s60
    %p69 = scmp.eq.s32.totalorder %s14, 0
    %p70 = por %p68, %p69
    %p71 = scmp.ne.s32.totalorder %s59, %s60
    %p72 = scmp.eq.s32.totalorder %s15, 1
    %p73 = por %p71, %p72
    %p75 = scmp.ne.s32.totalorder %s60, %s74
    %p76 = scmp.eq.s32.totalorder %s15, 0
    %p77 = por %p75, %p76
    %s79 = sadd.s32 %s78, 1
    %p82 = scmp.eq.s32.totalorder %s9, 1
    %p83 = scmp.ne.s32.totalorder %s78, %s80
    %p84 = scmp.eq.s32.totalorder %s9, 0
    %p85 = por %p83, %p84
    %p86 = scmp.ne.s32.totalorder %s78, %s80
    %p87 = scmp.eq.s32.totalorder %s14, 1
    %p88 = por %p86, %p87
    %p89 = scmp.ne.s32.totalorder %s80, %s81
    %p90 = scmp.eq.s32.totalorder %s14, 0
    %p91 = por %p89, %p90
    %p92 = scmp.ne.s32.totalorder %s80, %s81
    %p93 = scmp.eq.s32.totalorder %s15, 1
    %p94 = por %p92, %p93
    %p96 = scmp.ne.s32.totalorder %s81, %s95
    %p97 = scmp.eq.s32.totalorder %s15, 0
    %p98 = por %p96, %p97
    %s99 = ssub.s32 %s16, %s28
    %s100 = ssub.s32 %s17, %s24
    %s101 = sor.u32 %s99, %s100
    %p102 = scmp.eq.s32.totalorder %s101, 0
    %s104 = sadd.s32 %s103, 1
    %s105 = scalar_select %p102, %s103, %s104
    %p108 = pneg %p102
    %p109 = scmp.eq.s32.totalorder %s9, 1
    %p110 = por %p108, %p109
    %p111 = scmp.ne.s32.totalorder %s103, %s106
    %p112 = scmp.eq.s32.totalorder %s9, 0
    %p113 = por %p111, %p112
    %p114 = scmp.ne.s32.totalorder %s103, %s106
    %p115 = scmp.eq.s32.totalorder %s14, 1
    %p116 = por %p114, %p115
    %p117 = scmp.ne.s32.totalorder %s106, %s107
    %p118 = scmp.eq.s32.totalorder %s14, 0
    %p119 = por %p117, %p118
    %p120 = scmp.ne.s32.totalorder %s106, %s107
    %p121 = scmp.eq.s32.totalorder %s15, 1
    %p122 = por %p120, %p121
    %p124 = scmp.ne.s32.totalorder %s107, %s123
    %p125 = scmp.eq.s32.totalorder %s15, 0
    %p126 = por %p124, %p125
    %p127 = scmp.le.s32.totalorder 1, %s9
    %p128 = scmp.lt.s32.totalorder %s9, 3
    %p129 = pnand %p127, %p128
    %p130 = pneg %p129
    // Predicated region
    $region9: #{_lambda_.4} parent=5 // pred_check
      _
    $region10: #{_lambda_.4} parent=5 // pred_check_branch
      %132 = sbr.rel (%p129) target = $region12
    $region11: #{_lambda_.4} parent=5 // pred_region
      %s133 = ssub.s32 %s9, 1
      // Predicated region
      $region13: #{_lambda_.4} parent=11 // pred_check
        %p134 = pneg %p70
      $region14: #{_lambda_.4} parent=11 // pred_check_branch
        %136 = sbr.rel (%p134) target = $region16
      $region15: #{_lambda_.4} parent=11 // pred_region
        _
      $region16: #{_lambda_.4} parent=11 // pred_fallthru
        _
      // Predicated region
      $region17: #{_lambda_.4} parent=11 // pred_check
        %p137 = pneg %p91
      $region18: #{_lambda_.4} parent=11 // pred_check_branch
        %139 = sbr.rel (%p137) target = $region20
      $region19: #{_lambda_.4} parent=11 // pred_region
        _
      $region20: #{_lambda_.4} parent=11 // pred_fallthru
        _
    $region12: #{_lambda_.4} parent=5 // pred_fallthru
      _
    %p140 = scmp.lt.s32.totalorder %s9, 2
    // Predicated region
    $region21: #{_lambda_.4} parent=5 // pred_check
      %p141 = pneg %p140
    $region22: #{_lambda_.4} parent=5 // pred_check_branch
      %143 = sbr.rel (%p141) target = $region24
    $region23: #{_lambda_.4} parent=5 // pred_region
      // Predicated region
      $region25: #{_lambda_.4} parent=23 // pred_check
        %p144 = pneg %p43
      $region26: #{_lambda_.4} parent=23 // pred_check_branch
        %146 = sbr.rel (%p144) target = $region28
      $region27: #{_lambda_.4} parent=23 // pred_region
        %p147 = scmp.lt.s32.totalorder %s16, 1
        %s148 = scalar_select %p147, %s16, 1
        %p149 = scmp.lt.s32.totalorder %s17, 0
        %s150 = scalar_select %p149, %s17, 0
        %s151 = sadd.s32 %s150, %s148
        %s152 = smul.addr %s151, 2
        %s153 = scalar_lea.vmem %s0, %s152
      $region28: #{_lambda_.4} parent=23 // pred_fallthru
        _
    $region24: #{_lambda_.4} parent=5 // pred_fallthru
      _
    %p154 = scmp.le.s32.totalorder 1, %s9
    %p155 = scmp.lt.s32.totalorder %s9, 3
    %p156 = pnand %p154, %p155
    %p157 = pneg %p156
    // Predicated region
    $region29: #{_lambda_.4} parent=5 // pred_check
      _
    $region30: #{_lambda_.4} parent=5 // pred_check_branch
      %159 = sbr.rel (%p156) target = $region32
    $region31: #{_lambda_.4} parent=5 // pred_region
      %s160 = ssub.s32 %s9, 1
      %p161 = scmp.lt.s32.totalorder %s18, 1
      %s162 = scalar_select %p161, %s18, 1
      %p163 = scmp.lt.s32.totalorder %s19, 0
      %s164 = scalar_select %p163, %s19, 0
      %s165 = sadd.s32 %s164, %s162
      %s166 = smul.addr %s165, 2
      %s167 = scalar_lea.vmem %s0, %s166
      %p168 = pneg %p49
      %p169 = pneg %p46
      %p170 = pneg %p70
      %p171 = pneg %p67
      %p172 = pneg %p91
      %p173 = pneg %p88
      %p174 = pneg %p119
      %p175 = pneg %p116
      %p176 = scmp.lt.s32.totalorder %s18, 1
      %s177 = scalar_select %p176, %s18, 1
      %p178 = scmp.lt.s32.totalorder %s19, 0
      %s179 = scalar_select %p178, %s19, 0
      %s180 = smul.addr %s177, 8
      %s181 = sadd.s32 %s179, %s180
      %s182 = smul.addr %s181, 4
      %s183 = scalar_lea.vmem %s3, %s182
      %p184 = scmp.lt.s32.totalorder %s18, 1
      %s185 = scalar_select %p184, %s18, 1
      %p186 = scmp.lt.s32.totalorder %s19, 0
      %s187 = scalar_select %p186, %s19, 0
      %s188 = sadd.s32 %s187, %s185
      %s189 = smul.addr %s188, 2
      %s190 = scalar_lea.vmem %s0, %s189
      %p191 = scmp.lt.s32.totalorder %s18, 1
      %s192 = scalar_select %p191, %s18, 1
      %p193 = scmp.lt.s32.totalorder %s19, 0
      %s194 = scalar_select %p193, %s19, 0
      %s195 = smul.addr %s192, 8
      %s196 = sadd.s32 %s194, %s195
      %s197 = smul.addr %s196, 4
      %s198 = scalar_lea.vmem %s3, %s197
      %v200 = vld [vmem:[%s190] sm:$0x3]
      %v201 = vld [vmem:[%s1] sm:$0xf]
      %v202 = vld [vmem:[%s1 + $0x4] sm:$0xf]
      %v203 = vld [vmem:[%s1 + $0x8] sm:$0xf]
      %v204 = vld [vmem:[%s1 + $0xc] sm:$0xf]
      %v205 = vld [vmem:[%s1 + $0x10] sm:$0xf]
      %v206 = vld [vmem:[%s1 + $0x14] sm:$0xf]
      %v207 = vld [vmem:[%s1 + $0x18] sm:$0xf]
      %v208 = vld [vmem:[%s1 + $0x1c] sm:$0xf]
      %v209 = vld [vmem:[%s2] sm:$0xff]
      %v210 = vld [vmem:[%s2 + $0x8] sm:$0xff]
      %v211 = vld [vmem:[%s2 + $0x10] sm:$0xff]
      %v212 = vld [vmem:[%s2 + $0x18] sm:$0xff]
      %v213 = vld [vmem:[%s2 + $0x20] sm:$0xff]
      %v214 = vld [vmem:[%s2 + $0x28] sm:$0xff]
      %v215 = vld [vmem:[%s2 + $0x30] sm:$0xff]
      %v216 = vld [vmem:[%s2 + $0x38] sm:$0xff]
      %218 = vset.pattern.permute.xlu0 0
      %219 = vperm.xlu0 %218, %v209
      %v220 = vpop.permute.xlu0 %219
      %223 = vset.pattern.permute.xlu0 0
      %224 = vperm.xlu0 %223, %v210
      %v225 = vpop.permute.xlu0 %224
      %228 = vset.pattern.permute.xlu0 0
      %229 = vperm.xlu0 %228, %v211
      %v230 = vpop.permute.xlu0 %229
      %233 = vset.pattern.permute.xlu0 0
      %234 = vperm.xlu0 %233, %v212
      %v235 = vpop.permute.xlu0 %234
      %238 = vset.pattern.permute.xlu0 0
      %239 = vperm.xlu0 %238, %v213
      %v240 = vpop.permute.xlu0 %239
      %243 = vset.pattern.permute.xlu0 0
      %244 = vperm.xlu0 %243, %v214
      %v245 = vpop.permute.xlu0 %244
      %248 = vset.pattern.permute.xlu0 0
      %249 = vperm.xlu0 %248, %v215
      %v250 = vpop.permute.xlu0 %249
      %253 = vset.pattern.permute.xlu0 0
      %254 = vperm.xlu0 %253, %v216
      %v255 = vpop.permute.xlu0 %254
      %v265 = vunpack.c.l.b16 %v201
      %v266 = vunpack.c.l.b16 %v202
      %v267 = vunpack.c.l.b16 %v203
      %v268 = vunpack.c.l.b16 %v204
      %v269 = vunpack.c.l.b16 %v205
      %v270 = vunpack.c.l.b16 %v206
      %v271 = vunpack.c.l.b16 %v207
      %v272 = vunpack.c.l.b16 %v208
      %v273 = vpack.c.b16 %v266, %v265
      %v274 = vpack.c.b16 %v268, %v267
      %v275 = vpack.c.b16 %v270, %v269
      %v276 = vpack.c.b16 %v272, %v271
      %vm277 = vcmask 31744
      %v279 = vsel %vm277, %v273, 0
      %v282 = vsel %vm277, %v274, 0
      %v285 = vsel %vm277, %v275, 0
      %v288 = vsel %vm277, %v276, 0
      %vm290 = vcmask 1041408
      %v292 = vsel %vm290, %v200, 0
      %294 = vmatprep.subr.bf16.mxu0 0
      %295 = vmatpush1.bf16.msra.mxu0 0
      %296 = vmatprep.subr.bf16.mxu0 0
      %297 = vmatpush1.bf16.msra.mxu0 0
      %298 = vmatprep.subr.bf16.mxu0 0
      %299 = vmatpush1.bf16.msra.mxu0 0
      %300 = vmatprep.subr.bf16.mxu0 0
      %301 = vmatpush1.bf16.msra.mxu0 0
      %302 = vmatprep.subr.bf16.mxu0 0
      %303 = vmatpush1.bf16.msra.mxu0 0
      %304 = vmatprep.subr.bf16.mxu0 0
      %305 = vmatpush1.bf16.msra.mxu0 0
      %306 = vmatprep.subr.bf16.mxu0 0
      %307 = vmatpush1.bf16.msra.mxu0 0
      %308 = vmatprep.subr.bf16.mxu0 0
      %309 = vmatpush1.bf16.msra.mxu0 %v292
      %310 = vmatprep.subr.bf16.mxu0 0
      %311 = vmatpush2.bf16.msra.mxu0 0
      %312 = vmatprep.subr.bf16.mxu0 0
      %313 = vmatpush2.bf16.msra.mxu0 0
      %314 = vmatprep.subr.bf16.mxu0 0
      %315 = vmatpush2.bf16.msra.mxu0 0
      %316 = vmatprep.subr.bf16.mxu0 0
      %317 = vmatpush2.bf16.msra.mxu0 0
      %318 = vmatprep.subr.bf16.mxu0 0
      %319 = vmatpush2.bf16.msra.mxu0 0
      %320 = vmatprep.subr.bf16.mxu0 0
      %321 = vmatpush2.bf16.msra.mxu0 0
      %322 = vmatprep.subr.bf16.mxu0 0
      %323 = vmatpush2.bf16.msra.mxu0 0
      %324 = vmatprep.subr.bf16.mxu0 0
      %325 = vmatpush2.bf16.msra.mxu0 0
      %326 = vmatprep.mubr.bf16.mxu0 0
      %327 = vmatmul.mubr.bf16.gmra.mxu0 %v279
      %v328 = vpop.f32.mrf.mxu0
      %v329 = vadd.f32 %v220, %v328
      %v330 = vpop.f32.mrf.mxu0
      %v331 = vpop.f32.mrf.mxu0
      %v332 = vadd.f32 %v225, %v331
      %v333 = vpop.f32.mrf.mxu0
      %334 = vmatprep.mubr.bf16.mxu0 0
      %335 = vmatmul.mubr.bf16.gmra.mxu0 %v282
      %v336 = vpop.f32.mrf.mxu0
      %v337 = vadd.f32 %v230, %v336
      %v338 = vpop.f32.mrf.mxu0
      %v339 = vpop.f32.mrf.mxu0
      %v340 = vadd.f32 %v235, %v339
      %v341 = vpop.f32.mrf.mxu0
      %342 = vmatprep.mubr.bf16.mxu0 0
      %343 = vmatmul.mubr.bf16.gmra.mxu0 %v285
      %v344 = vpop.f32.mrf.mxu0
      %v345 = vadd.f32 %v240, %v344
      %v346 = vpop.f32.mrf.mxu0
      %v347 = vpop.f32.mrf.mxu0
      %v348 = vadd.f32 %v245, %v347
      %v349 = vpop.f32.mrf.mxu0
      %350 = vmatprep.mubr.bf16.mxu0 0
      %351 = vmatmul.mubr.bf16.gmra.mxu0 %v288
      %v352 = vpop.f32.mrf.mxu0
      %v353 = vadd.f32 %v250, %v352
      %v354 = vpop.f32.mrf.mxu0
      %v355 = vpop.f32.mrf.mxu0
      %v356 = vadd.f32 %v255, %v355
      %v357 = vpop.f32.mrf.mxu0
      %358 = vdwg.mxu0
      %v359 = vmax.f32 %v329, 0.0
      %v360 = vmax.f32 %v332, 0.0
      %v361 = vmax.f32 %v337, 0.0
      %v362 = vmax.f32 %v340, 0.0
      %v363 = vmax.f32 %v345, 0.0
      %v364 = vmax.f32 %v348, 0.0
      %v365 = vmax.f32 %v353, 0.0
      %v366 = vmax.f32 %v356, 0.0
      %v367 = vpack.c.bf16 %v360, %v359
      %v368 = vpack.c.bf16 %v362, %v361
      %v369 = vpack.c.bf16 %v364, %v363
      %v370 = vpack.c.bf16 %v366, %v365
      %v375 = vunpack.c.l.b16 %v367
      %v376 = vunpack.c.h.b16 %v367
      %v377 = vunpack.c.l.b16 %v368
      %v378 = vunpack.c.h.b16 %v368
      %v379 = vunpack.c.l.b16 %v369
      %v380 = vunpack.c.h.b16 %v369
      %v381 = vunpack.c.l.b16 %v370
      %v382 = vunpack.c.h.b16 %v370
      %v383 = vpack.c.b16 %v375, %v375
      %v384 = vpack.c.b16 %v376, %v376
      %v385 = vpack.c.b16 %v377, %v377
      %v386 = vpack.c.b16 %v378, %v378
      %v387 = vpack.c.b16 %v379, %v379
      %v388 = vpack.c.b16 %v380, %v380
      %v389 = vpack.c.b16 %v381, %v381
      %v390 = vpack.c.b16 %v382, %v382
      %399 = vst [vmem:[%s198] sm:$0xf] %v383
      %400 = vst [vmem:[%s198 + $0x4] sm:$0xf] %v384
      %401 = vst [vmem:[%s198 + $0x8] sm:$0xf] %v385
      %402 = vst [vmem:[%s198 + $0xc] sm:$0xf] %v386
      %403 = vst [vmem:[%s198 + $0x10] sm:$0xf] %v387
      %404 = vst [vmem:[%s198 + $0x14] sm:$0xf] %v388
      %405 = vst [vmem:[%s198 + $0x18] sm:$0xf] %v389
      %406 = vst [vmem:[%s198 + $0x1c] sm:$0xf] %v390
      %p407 = scmp.lt.s32.totalorder %s18, 1
      %s408 = scalar_select %p407, %s18, 1
      %p409 = scmp.lt.s32.totalorder %s19, 0
      %s410 = scalar_select %p409, %s19, 0
      %s411 = smul.addr %s408, 8
      %s412 = sadd.s32 %s410, %s411
      %s413 = smul.addr %s412, 4
      %s414 = scalar_lea.vmem %s3, %s413
      // Predicated region
      $region33: #{_lambda_.4} parent=31 // pred_check
        %p415 = pneg %p116
      $region34: #{_lambda_.4} parent=31 // pred_check_branch
        %417 = sbr.rel (%p415) target = $region36
      $region35: #{_lambda_.4} parent=31 // pred_region
        _
      $region36: #{_lambda_.4} parent=31 // pred_fallthru
        _
    $region32: #{_lambda_.4} parent=5 // pred_fallthru
      _
    %p418 = scmp.le.s32.totalorder 2, %s9
    // Predicated region
    $region37: #{_lambda_.4} parent=5 // pred_check
      %p419 = pneg %p418
    $region38: #{_lambda_.4} parent=5 // pred_check_branch
      %421 = sbr.rel (%p419) target = $region40
    $region39: #{_lambda_.4} parent=5 // pred_region
      %s422 = ssub.s32 %s9, 2
      // Predicated region
      $region41: #{_lambda_.4} parent=39 // pred_check
        %p423 = pneg %p122
      $region42: #{_lambda_.4} parent=39 // pred_check_branch
        %425 = sbr.rel (%p423) target = $region44
      $region43: #{_lambda_.4} parent=39 // pred_region
        %p426 = scmp.lt.s32.totalorder %s20, 1
        %s427 = scalar_select %p426, %s20, 1
        %p428 = scmp.lt.s32.totalorder %s21, 0
        %s429 = scalar_select %p428, %s21, 0
        %s430 = smul.addr %s427, 8
        %s431 = sadd.s32 %s429, %s430
        %s432 = smul.addr %s431, 4
        %s433 = scalar_lea.vmem %s3, %s432
      $region44: #{_lambda_.4} parent=39 // pred_fallthru
        _
    $region40: #{_lambda_.4} parent=5 // pred_fallthru
      _
  $region6: #{_lambda_.4} parent=0 // loop_footer
    %s13 = sadd.s32 1, %s9
  $region7: #{_lambda_.4} parent=0 // loop_footer_branch
    %8 = sbr.rel target = $region3
  $region8: #{_lambda_.4} parent=0 // loop_exit
    _

// kernel: _lambda_.5
$region0: #{_lambda_.5}
  #allocation0 [shape = 'u32[]', space=smem, size = 0x4, offset = 0x4, fixed_abs, tag = 'smem constant byte address 0x4 - core index']
  #allocation1 [shape = 'u32[144,128]{1,0:T(1,128)}', space=vmem, size = 0x12000, scoped, tag = 'internal scratch']
  %s0 = inlined_call_operand.vmem [shape: bf16[2,448,128], index: 0, kind: input, shape index: {}]
  %s1 = inlined_call_operand.vmem [shape: bf16[64,448], index: 1, kind: input, shape index: {}]
  %s2 = inlined_call_operand.vmem [shape: f32[64,1], index: 2, kind: input, shape index: {}]
  %s3 = inlined_call_operand.vmem [shape: bf16[2,64,128], index: 3, kind: output, shape index: {}]
  %s4 = sld [smem:[#allocation0]]
  $region45: #{_lambda_.5} parent=0
    _
  %s6 = ssub.s32 1, %s4
  %s7 = scalar_select 0, %s6, %s4
  loop: start=0, step=1, limit=4
  $region2: #{_lambda_.5} parent=0 // loop_pre_header
    _
  $region3: #{_lambda_.5} parent=0 // loop_header
    %s9 = sphi 0, %s13
    %p10 = scmp.ge.s32.totalorder %s9, 4
    %s16 = sphi 0, %s28
    %s17 = sphi 0, %s24
    %s18 = sphi 0, %s16
    %s19 = sphi 0, %s17
    %s20 = sphi 0, %s18
    %s21 = sphi 0, %s19
    %s33 = sphi 0, %s35
    %s36 = sphi 0, %s33
    %s37 = sphi 0, %s36
    %s53 = sphi 0, %s37
    %s57 = sphi 0, %s57
    %s59 = sphi 0, %s57
    %s60 = sphi 0, %s59
    %s74 = sphi 0, %s60
    %s78 = sphi 0, %s78
    %s80 = sphi 0, %s78
    %s81 = sphi 0, %s80
    %s95 = sphi 0, %s81
    %s103 = sphi 0, %s105
    %s106 = sphi 0, %s103
    %s107 = sphi 0, %s106
    %s123 = sphi 0, %s107
  $region4: #{_lambda_.5} parent=0 // loop_header_branch
    %12 = sbr.rel (%p10) target = $region8
  $region5: #{_lambda_.5} parent=0 // loop_body
    %s14 = ssub.s32 %s9, 1
    %s15 = ssub.s32 %s9, 2
    %s22 = sadd.s32 1, %s17
    %p23 = scmp.ge.s32.totalorder %s22, 1
    %s24 = scalar_select %p23, 0, %s22
    %s25 = sadd.s32 1, %s16
    %s26 = scalar_select %p23, %s25, %s16
    %p27 = scmp.ge.s32.totalorder %s26, 2
    %s28 = scalar_select %p27, 0, %s26
    %s29 = ssub.s32 %s16, %s28
    %s30 = ssub.s32 %s17, %s24
    %s31 = sor.u32 %s29, %s30
    %p32 = scmp.eq.s32.totalorder %s31, 0
    %s34 = sadd.s32 %s33, 1
    %s35 = scalar_select %p32, %s33, %s34
    %p38 = pneg %p32
    %p39 = scmp.eq.s32.totalorder %s9, 1
    %p40 = por %p38, %p39
    %p41 = scmp.ne.s32.totalorder %s33, %s36
    %p42 = scmp.eq.s32.totalorder %s9, 0
    %p43 = por %p41, %p42
    %p44 = scmp.ne.s32.totalorder %s33, %s36
    %p45 = scmp.eq.s32.totalorder %s14, 1
    %p46 = por %p44, %p45
    %p47 = scmp.ne.s32.totalorder %s36, %s37
    %p48 = scmp.eq.s32.totalorder %s14, 0
    %p49 = por %p47, %p48
    %p50 = scmp.ne.s32.totalorder %s36, %s37
    %p51 = scmp.eq.s32.totalorder %s15, 1
    %p52 = por %p50, %p51
    %p54 = scmp.ne.s32.totalorder %s37, %s53
    %p55 = scmp.eq.s32.totalorder %s15, 0
    %p56 = por %p54, %p55
    %s58 = sadd.s32 %s57, 1
    %p61 = scmp.eq.s32.totalorder %s9, 1
    %p62 = scmp.ne.s32.totalorder %s57, %s59
    %p63 = scmp.eq.s32.totalorder %s9, 0
    %p64 = por %p62, %p63
    %p65 = scmp.ne.s32.totalorder %s57, %s59
    %p66 = scmp.eq.s32.totalorder %s14, 1
    %p67 = por %p65, %p66
    %p68 = scmp.ne.s32.totalorder %s59, %s60
    %p69 = scmp.eq.s32.totalorder %s14, 0
    %p70 = por %p68, %p69
    %p71 = scmp.ne.s32.totalorder %s59, %s60
    %p72 = scmp.eq.s32.totalorder %s15, 1
    %p73 = por %p71, %p72
    %p75 = scmp.ne.s32.totalorder %s60, %s74
    %p76 = scmp.eq.s32.totalorder %s15, 0
    %p77 = por %p75, %p76
    %s79 = sadd.s32 %s78, 1
    %p82 = scmp.eq.s32.totalorder %s9, 1
    %p83 = scmp.ne.s32.totalorder %s78, %s80
    %p84 = scmp.eq.s32.totalorder %s9, 0
    %p85 = por %p83, %p84
    %p86 = scmp.ne.s32.totalorder %s78, %s80
    %p87 = scmp.eq.s32.totalorder %s14, 1
    %p88 = por %p86, %p87
    %p89 = scmp.ne.s32.totalorder %s80, %s81
    %p90 = scmp.eq.s32.totalorder %s14, 0
    %p91 = por %p89, %p90
    %p92 = scmp.ne.s32.totalorder %s80, %s81
    %p93 = scmp.eq.s32.totalorder %s15, 1
    %p94 = por %p92, %p93
    %p96 = scmp.ne.s32.totalorder %s81, %s95
    %p97 = scmp.eq.s32.totalorder %s15, 0
    %p98 = por %p96, %p97
    %s99 = ssub.s32 %s16, %s28
    %s100 = ssub.s32 %s17, %s24
    %s101 = sor.u32 %s99, %s100
    %p102 = scmp.eq.s32.totalorder %s101, 0
    %s104 = sadd.s32 %s103, 1
    %s105 = scalar_select %p102, %s103, %s104
    %p108 = pneg %p102
    %p109 = scmp.eq.s32.totalorder %s9, 1
    %p110 = por %p108, %p109
    %p111 = scmp.ne.s32.totalorder %s103, %s106
    %p112 = scmp.eq.s32.totalorder %s9, 0
    %p113 = por %p111, %p112
    %p114 = scmp.ne.s32.totalorder %s103, %s106
    %p115 = scmp.eq.s32.totalorder %s14, 1
    %p116 = por %p114, %p115
    %p117 = scmp.ne.s32.totalorder %s106, %s107
    %p118 = scmp.eq.s32.totalorder %s14, 0
    %p119 = por %p117, %p118
    %p120 = scmp.ne.s32.totalorder %s106, %s107
    %p121 = scmp.eq.s32.totalorder %s15, 1
    %p122 = por %p120, %p121
    %p124 = scmp.ne.s32.totalorder %s107, %s123
    %p125 = scmp.eq.s32.totalorder %s15, 0
    %p126 = por %p124, %p125
    %p127 = scmp.le.s32.totalorder 1, %s9
    %p128 = scmp.lt.s32.totalorder %s9, 3
    %p129 = pnand %p127, %p128
    %p130 = pneg %p129
    // Predicated region
    $region9: #{_lambda_.5} parent=5 // pred_check
      _
    $region10: #{_lambda_.5} parent=5 // pred_check_branch
      %132 = sbr.rel (%p129) target = $region12
    $region11: #{_lambda_.5} parent=5 // pred_region
      %s133 = ssub.s32 %s9, 1
      // Predicated region
      $region13: #{_lambda_.5} parent=11 // pred_check
        %p134 = pneg %p70
      $region14: #{_lambda_.5} parent=11 // pred_check_branch
        %136 = sbr.rel (%p134) target = $region16
      $region15: #{_lambda_.5} parent=11 // pred_region
        _
      $region16: #{_lambda_.5} parent=11 // pred_fallthru
        _
      // Predicated region
      $region17: #{_lambda_.5} parent=11 // pred_check
        %p137 = pneg %p91
      $region18: #{_lambda_.5} parent=11 // pred_check_branch
        %139 = sbr.rel (%p137) target = $region20
      $region19: #{_lambda_.5} parent=11 // pred_region
        _
      $region20: #{_lambda_.5} parent=11 // pred_fallthru
        _
    $region12: #{_lambda_.5} parent=5 // pred_fallthru
      _
    %p140 = scmp.lt.s32.totalorder %s9, 2
    // Predicated region
    $region21: #{_lambda_.5} parent=5 // pred_check
      %p141 = pneg %p140
    $region22: #{_lambda_.5} parent=5 // pred_check_branch
      %143 = sbr.rel (%p141) target = $region24
    $region23: #{_lambda_.5} parent=5 // pred_region
      // Predicated region
      $region25: #{_lambda_.5} parent=23 // pred_check
        %p144 = pneg %p43
      $region26: #{_lambda_.5} parent=23 // pred_check_branch
        %146 = sbr.rel (%p144) target = $region28
      $region27: #{_lambda_.5} parent=23 // pred_region
        %p147 = scmp.lt.s32.totalorder %s16, 1
        %s148 = scalar_select %p147, %s16, 1
        %p149 = scmp.lt.s32.totalorder %s17, 0
        %s150 = scalar_select %p149, %s17, 0
        %s151 = smul.addr %s148, 56
        %s152 = sadd.s32 %s150, %s151
        %s153 = smul.addr %s152, 4
        %s154 = scalar_lea.vmem %s0, %s153
      $region28: #{_lambda_.5} parent=23 // pred_fallthru
        _
    $region24: #{_lambda_.5} parent=5 // pred_fallthru
      _
    %p155 = scmp.le.s32.totalorder 1, %s9
    %p156 = scmp.lt.s32.totalorder %s9, 3
    %p157 = pnand %p155, %p156
    %p158 = pneg %p157
    // Predicated region
    $region29: #{_lambda_.5} parent=5 // pred_check
      _
    $region30: #{_lambda_.5} parent=5 // pred_check_branch
      %160 = sbr.rel (%p157) target = $region32
    $region31: #{_lambda_.5} parent=5 // pred_region
      %s161 = ssub.s32 %s9, 1
      %p162 = scmp.lt.s32.totalorder %s18, 1
      %s163 = scalar_select %p162, %s18, 1
      %p164 = scmp.lt.s32.totalorder %s19, 0
      %s165 = scalar_select %p164, %s19, 0
      %s166 = smul.addr %s163, 56
      %s167 = sadd.s32 %s165, %s166
      %s168 = smul.addr %s167, 4
      %s169 = scalar_lea.vmem %s0, %s168
      %p170 = pneg %p49
      %p171 = pneg %p46
      %p172 = pneg %p70
      %p173 = pneg %p67
      %p174 = pneg %p91
      %p175 = pneg %p88
      %p176 = pneg %p119
      %p177 = pneg %p116
      %p178 = scmp.lt.s32.totalorder %s18, 1
      %s179 = scalar_select %p178, %s18, 1
      %p180 = scmp.lt.s32.totalorder %s19, 0
      %s181 = scalar_select %p180, %s19, 0
      %s182 = smul.addr %s179, 8
      %s183 = sadd.s32 %s181, %s182
      %s184 = smul.addr %s183, 4
      %s185 = scalar_lea.vmem %s3, %s184
      %p186 = scmp.lt.s32.totalorder %s18, 1
      %s187 = scalar_select %p186, %s18, 1
      %p188 = scmp.lt.s32.totalorder %s19, 0
      %s189 = scalar_select %p188, %s19, 0
      %s190 = smul.addr %s187, 56
      %s191 = sadd.s32 %s189, %s190
      %s192 = smul.addr %s191, 4
      %s193 = scalar_lea.vmem %s0, %s192
      %p194 = scmp.lt.s32.totalorder %s18, 1
      %s195 = scalar_select %p194, %s18, 1
      %p196 = scmp.lt.s32.totalorder %s19, 0
      %s197 = scalar_select %p196, %s19, 0
      %s198 = smul.addr %s195, 8
      %s199 = sadd.s32 %s197, %s198
      %s200 = smul.addr %s199, 4
      %s201 = scalar_lea.vmem %s3, %s200
      %v203 = vld [vmem:[%s193] sm:$0xf]
      %v204 = vld [vmem:[%s193 + $0x4] sm:$0xf]
      %v205 = vld [vmem:[%s193 + $0x8] sm:$0xf]
      %v206 = vld [vmem:[%s193 + $0xc] sm:$0xf]
      %v207 = vld [vmem:[%s193 + $0x10] sm:$0xf]
      %v208 = vld [vmem:[%s193 + $0x14] sm:$0xf]
      %v209 = vld [vmem:[%s193 + $0x18] sm:$0xf]
      %v210 = vld [vmem:[%s193 + $0x1c] sm:$0xf]
      %v211 = vld [vmem:[%s193 + $0x20] sm:$0xf]
      %v212 = vld [vmem:[%s193 + $0x24] sm:$0xf]
      %v213 = vld [vmem:[%s193 + $0x28] sm:$0xf]
      %v214 = vld [vmem:[%s193 + $0x2c] sm:$0xf]
      %v215 = vld [vmem:[%s193 + $0x30] sm:$0xf]
      %v216 = vld [vmem:[%s193 + $0x34] sm:$0xf]
      %v217 = vld [vmem:[%s193 + $0x38] sm:$0xf]
      %v218 = vld [vmem:[%s193 + $0x3c] sm:$0xf]
      %v219 = vld [vmem:[%s193 + $0x40] sm:$0xf]
      %v220 = vld [vmem:[%s193 + $0x44] sm:$0xf]
      %v221 = vld [vmem:[%s193 + $0x48] sm:$0xf]
      %v222 = vld [vmem:[%s193 + $0x4c] sm:$0xf]
      %v223 = vld [vmem:[%s193 + $0x50] sm:$0xf]
      %v224 = vld [vmem:[%s193 + $0x54] sm:$0xf]
      %v225 = vld [vmem:[%s193 + $0x58] sm:$0xf]
      %v226 = vld [vmem:[%s193 + $0x5c] sm:$0xf]
      %v227 = vld [vmem:[%s193 + $0x60] sm:$0xf]
      %v228 = vld [vmem:[%s193 + $0x64] sm:$0xf]
      %v229 = vld [vmem:[%s193 + $0x68] sm:$0xf]
      %v230 = vld [vmem:[%s193 + $0x6c] sm:$0xf]
      %v231 = vld [vmem:[%s193 + $0x70] sm:$0xf]
      %v232 = vld [vmem:[%s193 + $0x74] sm:$0xf]
      %v233 = vld [vmem:[%s193 + $0x78] sm:$0xf]
      %v234 = vld [vmem:[%s193 + $0x7c] sm:$0xf]
      %v235 = vld [vmem:[%s193 + $0x80] sm:$0xf]
      %v236 = vld [vmem:[%s193 + $0x84] sm:$0xf]
      %v237 = vld [vmem:[%s193 + $0x88] sm:$0xf]
      %v238 = vld [vmem:[%s193 + $0x8c] sm:$0xf]
      %v239 = vld [vmem:[%s193 + $0x90] sm:$0xf]
      %v240 = vld [vmem:[%s193 + $0x94] sm:$0xf]
      %v241 = vld [vmem:[%s193 + $0x98] sm:$0xf]
      %v242 = vld [vmem:[%s193 + $0x9c] sm:$0xf]
      %v243 = vld [vmem:[%s193 + $0xa0] sm:$0xf]
      %v244 = vld [vmem:[%s193 + $0xa4] sm:$0xf]
      %v245 = vld [vmem:[%s193 + $0xa8] sm:$0xf]
      %v246 = vld [vmem:[%s193 + $0xac] sm:$0xf]
      %v247 = vld [vmem:[%s193 + $0xb0] sm:$0xf]
      %v248 = vld [vmem:[%s193 + $0xb4] sm:$0xf]
      %v249 = vld [vmem:[%s193 + $0xb8] sm:$0xf]
      %v250 = vld [vmem:[%s193 + $0xbc] sm:$0xf]
      %v251 = vld [vmem:[%s193 + $0xc0] sm:$0xf]
      %v252 = vld [vmem:[%s193 + $0xc4] sm:$0xf]
      %v253 = vld [vmem:[%s193 + $0xc8] sm:$0xf]
      %v254 = vld [vmem:[%s193 + $0xcc] sm:$0xf]
      %v255 = vld [vmem:[%s193 + $0xd0] sm:$0xf]
      %v256 = vld [vmem:[%s193 + $0xd4] sm:$0xf]
      %v257 = vld [vmem:[%s193 + $0xd8] sm:$0xf]
      %v258 = vld [vmem:[%s193 + $0xdc] sm:$0xf]
      %v259 = vld [vmem:[%s1] sm:$0xff]
      %v260 = vld [vmem:[%s1 + $0x8] sm:$0xff]
      %v261 = vld [vmem:[%s1 + $0x10] sm:$0xff]
      %v262 = vld [vmem:[%s1 + $0x18] sm:$0xff]
      %v263 = vld [vmem:[%s1 + $0x20] sm:$0xff]
      %v264 = vld [vmem:[%s1 + $0x28] sm:$0xff]
      %v265 = vld [vmem:[%s1 + $0x30] sm:$0xff]
      %v266 = vld [vmem:[%s1 + $0x38] sm:$0xff]
      %v267 = vld [vmem:[%s1 + $0x40] sm:$0xff]
      %v268 = vld [vmem:[%s1 + $0x48] sm:$0xff]
      %v269 = vld [vmem:[%s1 + $0x50] sm:$0xff]
      %v270 = vld [vmem:[%s1 + $0x58] sm:$0xff]
      %v271 = vld [vmem:[%s1 + $0x60] sm:$0xff]
      %v272 = vld [vmem:[%s1 + $0x68] sm:$0xff]
      %v273 = vld [vmem:[%s1 + $0x70] sm:$0xff]
      %v274 = vld [vmem:[%s1 + $0x78] sm:$0xff]
      %v275 = vld [vmem:[%s2] sm:$0xff]
      %v276 = vld [vmem:[%s2 + $0x8] sm:$0xff]
      %v277 = vld [vmem:[%s2 + $0x10] sm:$0xff]
      %v278 = vld [vmem:[%s2 + $0x18] sm:$0xff]
      %v279 = vld [vmem:[%s2 + $0x20] sm:$0xff]
      %v280 = vld [vmem:[%s2 + $0x28] sm:$0xff]
      %v281 = vld [vmem:[%s2 + $0x30] sm:$0xff]
      %v282 = vld [vmem:[%s2 + $0x38] sm:$0xff]
      %284 = vset.pattern.permute.xlu0 0
      %285 = vperm.xlu0 %284, %v275
      %v286 = vpop.permute.xlu0 %285
      %289 = vset.pattern.permute.xlu0 0
      %290 = vperm.xlu0 %289, %v276
      %v291 = vpop.permute.xlu0 %290
      %294 = vset.pattern.permute.xlu0 0
      %295 = vperm.xlu0 %294, %v277
      %v296 = vpop.permute.xlu0 %295
      %299 = vset.pattern.permute.xlu0 0
      %300 = vperm.xlu0 %299, %v278
      %v301 = vpop.permute.xlu0 %300
      %304 = vset.pattern.permute.xlu0 0
      %305 = vperm.xlu0 %304, %v279
      %v306 = vpop.permute.xlu0 %305
      %309 = vset.pattern.permute.xlu0 0
      %310 = vperm.xlu0 %309, %v280
      %v311 = vpop.permute.xlu0 %310
      %314 = vset.pattern.permute.xlu0 0
      %315 = vperm.xlu0 %314, %v281
      %v316 = vpop.permute.xlu0 %315
      %319 = vset.pattern.permute.xlu0 0
      %320 = vperm.xlu0 %319, %v282
      %v321 = vpop.permute.xlu0 %320
      %v339 = vunpack.c.l.b16 %v259
      %v340 = vunpack.c.h.b16 %v259
      %v341 = vunpack.c.l.b16 %v260
      %v342 = vunpack.c.h.b16 %v260
      %v343 = vunpack.c.l.b16 %v261
      %v344 = vunpack.c.h.b16 %v261
      %v345 = vunpack.c.l.b16 %v262
      %v346 = vunpack.c.h.b16 %v262
      %v347 = vunpack.c.l.b16 %v263
      %v348 = vunpack.c.h.b16 %v263
      %v349 = vunpack.c.l.b16 %v264
      %v350 = vunpack.c.h.b16 %v264
      %v351 = vunpack.c.l.b16 %v265
      %v352 = vunpack.c.h.b16 %v265
      %v353 = vunpack.c.l.b16 %v266
      %v354 = vunpack.c.h.b16 %v266
      %v355 = vunpack.c.l.b16 %v267
      %v356 = vunpack.c.h.b16 %v267
      %v357 = vunpack.c.l.b16 %v268
      %v358 = vunpack.c.h.b16 %v268
      %v359 = vunpack.c.l.b16 %v269
      %v360 = vunpack.c.h.b16 %v269
      %v361 = vunpack.c.l.b16 %v270
      %v362 = vunpack.c.h.b16 %v270
      %v363 = vunpack.c.l.b16 %v271
      %v364 = vunpack.c.h.b16 %v271
      %v365 = vunpack.c.l.b16 %v272
      %v366 = vunpack.c.h.b16 %v272
      %v367 = vunpack.c.l.b16 %v273
      %v368 = vunpack.c.h.b16 %v273
      %v369 = vunpack.c.l.b16 %v274
      %v370 = vunpack.c.h.b16 %v274
      %v371 = vpack.c.b16 %v343, %v339
      %v372 = vpack.c.b16 %v344, %v340
      %v373 = vpack.c.b16 %v345, %v341
      %v374 = vpack.c.b16 %v346, %v342
      %v375 = vpack.c.b16 %v351, %v347
      %v376 = vpack.c.b16 %v352, %v348
      %v377 = vpack.c.b16 %v353, %v349
      %v378 = vpack.c.b16 %v354, %v350
      %v379 = vpack.c.b16 %v359, %v355
      %v380 = vpack.c.b16 %v360, %v356
      %v381 = vpack.c.b16 %v361, %v357
      %v382 = vpack.c.b16 %v362, %v358
      %v383 = vpack.c.b16 %v367, %v363
      %v384 = vpack.c.b16 %v368, %v364
      %v385 = vpack.c.b16 %v369, %v365
      %v386 = vpack.c.b16 %v370, %v366
      %v455 = vunpack.c.l.b16 %v203
      %v456 = vunpack.c.l.b16 %v204
      %v457 = vunpack.c.l.b16 %v205
      %v458 = vunpack.c.l.b16 %v206
      %v459 = vunpack.c.l.b16 %v207
      %v460 = vunpack.c.l.b16 %v208
      %v461 = vunpack.c.l.b16 %v209
      %v462 = vunpack.c.l.b16 %v210
      %v463 = vunpack.c.l.b16 %v211
      %v464 = vunpack.c.l.b16 %v212
      %v465 = vunpack.c.l.b16 %v213
      %v466 = vunpack.c.l.b16 %v214
      %v467 = vunpack.c.l.b16 %v215
      %v468 = vunpack.c.l.b16 %v216
      %v469 = vunpack.c.l.b16 %v217
      %v470 = vunpack.c.l.b16 %v218
      %v471 = vunpack.c.l.b16 %v219
      %v472 = vunpack.c.l.b16 %v220
      %v473 = vunpack.c.l.b16 %v221
      %v474 = vunpack.c.l.b16 %v222
      %v475 = vunpack.c.l.b16 %v223
      %v476 = vunpack.c.l.b16 %v224
      %v477 = vunpack.c.l.b16 %v225
      %v478 = vunpack.c.l.b16 %v226
      %v479 = vunpack.c.l.b16 %v227
      %v480 = vunpack.c.l.b16 %v228
      %v481 = vunpack.c.l.b16 %v229
      %v482 = vunpack.c.l.b16 %v230
      %v483 = vunpack.c.l.b16 %v231
      %v484 = vunpack.c.l.b16 %v232
      %v485 = vunpack.c.l.b16 %v233
      %v486 = vunpack.c.l.b16 %v234
      %v487 = vunpack.c.l.b16 %v235
      %v488 = vunpack.c.l.b16 %v236
      %v489 = vunpack.c.l.b16 %v237
      %v490 = vunpack.c.l.b16 %v238
      %v491 = vunpack.c.l.b16 %v239
      %v492 = vunpack.c.l.b16 %v240
      %v493 = vunpack.c.l.b16 %v241
      %v494 = vunpack.c.l.b16 %v242
      %v495 = vunpack.c.l.b16 %v243
      %v496 = vunpack.c.l.b16 %v244
      %v497 = vunpack.c.l.b16 %v245
      %v498 = vunpack.c.l.b16 %v246
      %v499 = vunpack.c.l.b16 %v247
      %v500 = vunpack.c.l.b16 %v248
      %v501 = vunpack.c.l.b16 %v249
      %v502 = vunpack.c.l.b16 %v250
      %v503 = vunpack.c.l.b16 %v251
      %v504 = vunpack.c.l.b16 %v252
      %v505 = vunpack.c.l.b16 %v253
      %v506 = vunpack.c.l.b16 %v254
      %v507 = vunpack.c.l.b16 %v255
      %v508 = vunpack.c.l.b16 %v256
      %v509 = vunpack.c.l.b16 %v257
      %v510 = vunpack.c.l.b16 %v258
      %v511 = vpack.c.b16 %v456, %v455
      %v512 = vpack.c.b16 %v458, %v457
      %v513 = vpack.c.b16 %v460, %v459
      %v514 = vpack.c.b16 %v462, %v461
      %v515 = vpack.c.b16 %v464, %v463
      %v516 = vpack.c.b16 %v466, %v465
      %v517 = vpack.c.b16 %v468, %v467
      %v518 = vpack.c.b16 %v470, %v469
      %v519 = vpack.c.b16 %v472, %v471
      %v520 = vpack.c.b16 %v474, %v473
      %v521 = vpack.c.b16 %v476, %v475
      %v522 = vpack.c.b16 %v478, %v477
      %v523 = vpack.c.b16 %v480, %v479
      %v524 = vpack.c.b16 %v482, %v481
      %v525 = vpack.c.b16 %v484, %v483
      %v526 = vpack.c.b16 %v486, %v485
      %v527 = vpack.c.b16 %v488, %v487
      %v528 = vpack.c.b16 %v490, %v489
      %v529 = vpack.c.b16 %v492, %v491
      %v530 = vpack.c.b16 %v494, %v493
      %v531 = vpack.c.b16 %v496, %v495
      %v532 = vpack.c.b16 %v498, %v497
      %v533 = vpack.c.b16 %v500, %v499
      %v534 = vpack.c.b16 %v502, %v501
      %v535 = vpack.c.b16 %v504, %v503
      %v536 = vpack.c.b16 %v506, %v505
      %v537 = vpack.c.b16 %v508, %v507
      %v538 = vpack.c.b16 %v510, %v509
      %vm567 = vcmask 523264
      %v569 = vsel %vm567, %v374, 0
      %v572 = vsel %vm567, %v378, 0
      %v575 = vsel %vm567, %v382, 0
      %v578 = vsel %vm567, %v386, 0
      %580 = vmatprep.subr.bf16.mxu0 0
      %581 = vmatpush1.bf16.msra.mxu0 %v518
      %582 = vmatprep.subr.bf16.mxu0 0
      %583 = vmatpush1.bf16.msra.mxu0 %v517
      %584 = vmatprep.subr.bf16.mxu0 0
      %585 = vmatpush1.bf16.msra.mxu0 %v516
      %586 = vmatprep.subr.bf16.mxu0 0
      %587 = vmatpush1.bf16.msra.mxu0 %v515
      %588 = vmatprep.subr.bf16.mxu0 0
      %589 = vmatpush1.bf16.msra.mxu0 %v514
      %590 = vmatprep.subr.bf16.mxu0 0
      %591 = vmatpush1.bf16.msra.mxu0 %v513
      %592 = vmatprep.subr.bf16.mxu0 0
      %593 = vmatpush1.bf16.msra.mxu0 %v512
      %594 = vmatprep.subr.bf16.mxu0 0
      %595 = vmatpush1.bf16.msra.mxu0 %v511
      %596 = vmatprep.subr.bf16.mxu0 0
      %597 = vmatpush2.bf16.msra.mxu0 %v526
      %598 = vmatprep.subr.bf16.mxu0 0
      %599 = vmatpush2.bf16.msra.mxu0 %v525
      %600 = vmatprep.subr.bf16.mxu0 0
      %601 = vmatpush2.bf16.msra.mxu0 %v524
      %602 = vmatprep.subr.bf16.mxu0 0
      %603 = vmatpush2.bf16.msra.mxu0 %v523
      %604 = vmatprep.subr.bf16.mxu0 0
      %605 = vmatpush2.bf16.msra.mxu0 %v522
      %606 = vmatprep.subr.bf16.mxu0 0
      %607 = vmatpush2.bf16.msra.mxu0 %v521
      %608 = vmatprep.subr.bf16.mxu0 0
      %609 = vmatpush2.bf16.msra.mxu0 %v520
      %610 = vmatprep.subr.bf16.mxu0 0
      %611 = vmatpush2.bf16.msra.mxu0 %v519
      %612 = vmatprep.mubr.bf16.mxu0 %v372
      %613 = vmatmul.mubr.bf16.gmra.mxu0 %v371
      %v614 = vpop.f32.mrf.mxu0
      %v615 = vadd.f32 %v286, %v614
      %v616 = vpop.f32.mrf.mxu0
      %v617 = vpop.f32.mrf.mxu0
      %v618 = vadd.f32 %v291, %v617
      %v619 = vpop.f32.mrf.mxu0
      %620 = vmatprep.mubr.bf16.mxu0 %v376
      %621 = vmatmul.mubr.bf16.gmra.mxu0 %v375
      %v622 = vpop.f32.mrf.mxu0
      %v623 = vadd.f32 %v296, %v622
      %v624 = vpop.f32.mrf.mxu0
      %v625 = vpop.f32.mrf.mxu0
      %v626 = vadd.f32 %v301, %v625
      %v627 = vpop.f32.mrf.mxu0
      %628 = vmatprep.mubr.bf16.mxu0 %v380
      %629 = vmatmul.mubr.bf16.gmra.mxu0 %v379
      %v630 = vpop.f32.mrf.mxu0
      %v631 = vadd.f32 %v306, %v630
      %v632 = vpop.f32.mrf.mxu0
      %v633 = vpop.f32.mrf.mxu0
      %v634 = vadd.f32 %v311, %v633
      %v635 = vpop.f32.mrf.mxu0
      %636 = vmatprep.mubr.bf16.mxu0 %v384
      %637 = vmatmul.mubr.bf16.gmra.mxu0 %v383
      %v638 = vpop.f32.mrf.mxu0
      %v639 = vadd.f32 %v316, %v638
      %v640 = vpop.f32.mrf.mxu0
      %v641 = vpop.f32.mrf.mxu0
      %v642 = vadd.f32 %v321, %v641
      %v643 = vpop.f32.mrf.mxu0
      %644 = vdwg.mxu0
      %645 = vmatprep.subr.bf16.mxu0 0
      %646 = vmatpush1.bf16.msra.mxu0 %v534
      %647 = vmatprep.subr.bf16.mxu0 0
      %648 = vmatpush1.bf16.msra.mxu0 %v533
      %649 = vmatprep.subr.bf16.mxu0 0
      %650 = vmatpush1.bf16.msra.mxu0 %v532
      %651 = vmatprep.subr.bf16.mxu0 0
      %652 = vmatpush1.bf16.msra.mxu0 %v531
      %653 = vmatprep.subr.bf16.mxu0 0
      %654 = vmatpush1.bf16.msra.mxu0 %v530
      %655 = vmatprep.subr.bf16.mxu0 0
      %656 = vmatpush1.bf16.msra.mxu0 %v529
      %657 = vmatprep.subr.bf16.mxu0 0
      %658 = vmatpush1.bf16.msra.mxu0 %v528
      %659 = vmatprep.subr.bf16.mxu0 0
      %660 = vmatpush1.bf16.msra.mxu0 %v527
      %661 = vmatprep.subr.bf16.mxu0 0
      %662 = vmatpush2.bf16.msra.mxu0 0
      %663 = vmatprep.subr.bf16.mxu0 0
      %664 = vmatpush2.bf16.msra.mxu0 0
      %665 = vmatprep.subr.bf16.mxu0 0
      %666 = vmatpush2.bf16.msra.mxu0 0
      %667 = vmatprep.subr.bf16.mxu0 0
      %668 = vmatpush2.bf16.msra.mxu0 0
      %669 = vmatprep.subr.bf16.mxu0 0
      %670 = vmatpush2.bf16.msra.mxu0 %v538
      %671 = vmatprep.subr.bf16.mxu0 0
      %672 = vmatpush2.bf16.msra.mxu0 %v537
      %673 = vmatprep.subr.bf16.mxu0 0
      %674 = vmatpush2.bf16.msra.mxu0 %v536
      %675 = vmatprep.subr.bf16.mxu0 0
      %676 = vmatpush2.bf16.msra.mxu0 %v535
      %677 = vmatprep.mubr.bf16.mxu0 %v569
      %678 = vmatmul.mubr.bf16.gmra.mxu0 %v373
      %v679 = vpop.f32.mrf.mxu0
      %v680 = vadd.f32 %v615, %v679
      %v681 = vpop.f32.mrf.mxu0
      %v682 = vpop.f32.mrf.mxu0
      %v683 = vadd.f32 %v618, %v682
      %v684 = vpop.f32.mrf.mxu0
      %685 = vmatprep.mubr.bf16.mxu0 %v572
      %686 = vmatmul.mubr.bf16.gmra.mxu0 %v377
      %v687 = vpop.f32.mrf.mxu0
      %v688 = vadd.f32 %v623, %v687
      %v689 = vpop.f32.mrf.mxu0
      %v690 = vpop.f32.mrf.mxu0
      %v691 = vadd.f32 %v626, %v690
      %v692 = vpop.f32.mrf.mxu0
      %693 = vmatprep.mubr.bf16.mxu0 %v575
      %694 = vmatmul.mubr.bf16.gmra.mxu0 %v381
      %v695 = vpop.f32.mrf.mxu0
      %v696 = vadd.f32 %v631, %v695
      %v697 = vpop.f32.mrf.mxu0
      %v698 = vpop.f32.mrf.mxu0
      %v699 = vadd.f32 %v634, %v698
      %v700 = vpop.f32.mrf.mxu0
      %701 = vmatprep.mubr.bf16.mxu0 %v578
      %702 = vmatmul.mubr.bf16.gmra.mxu0 %v385
      %v703 = vpop.f32.mrf.mxu0
      %v704 = vadd.f32 %v639, %v703
      %v705 = vpop.f32.mrf.mxu0
      %v706 = vpop.f32.mrf.mxu0
      %v707 = vadd.f32 %v642, %v706
      %v708 = vpop.f32.mrf.mxu0
      %709 = vdwg.mxu0
      %v710 = vmax.f32 %v680, 0.0
      %v711 = vmax.f32 %v683, 0.0
      %v712 = vmax.f32 %v688, 0.0
      %v713 = vmax.f32 %v691, 0.0
      %v714 = vmax.f32 %v696, 0.0
      %v715 = vmax.f32 %v699, 0.0
      %v716 = vmax.f32 %v704, 0.0
      %v717 = vmax.f32 %v707, 0.0
      %v718 = vpack.c.bf16 %v711, %v710
      %v719 = vpack.c.bf16 %v713, %v712
      %v720 = vpack.c.bf16 %v715, %v714
      %v721 = vpack.c.bf16 %v717, %v716
      %v726 = vunpack.c.l.b16 %v718
      %v727 = vunpack.c.h.b16 %v718
      %v728 = vunpack.c.l.b16 %v719
      %v729 = vunpack.c.h.b16 %v719
      %v730 = vunpack.c.l.b16 %v720
      %v731 = vunpack.c.h.b16 %v720
      %v732 = vunpack.c.l.b16 %v721
      %v733 = vunpack.c.h.b16 %v721
      %v734 = vpack.c.b16 %v726, %v726
      %v735 = vpack.c.b16 %v727, %v727
      %v736 = vpack.c.b16 %v728, %v728
      %v737 = vpack.c.b16 %v729, %v729
      %v738 = vpack.c.b16 %v730, %v730
      %v739 = vpack.c.b16 %v731, %v731
      %v740 = vpack.c.b16 %v732, %v732
      %v741 = vpack.c.b16 %v733, %v733
      %750 = vst [vmem:[%s201] sm:$0xf] %v734
      %751 = vst [vmem:[%s201 + $0x4] sm:$0xf] %v735
      %752 = vst [vmem:[%s201 + $0x8] sm:$0xf] %v736
      %753 = vst [vmem:[%s201 + $0xc] sm:$0xf] %v737
      %754 = vst [vmem:[%s201 + $0x10] sm:$0xf] %v738
      %755 = vst [vmem:[%s201 + $0x14] sm:$0xf] %v739
      %756 = vst [vmem:[%s201 + $0x18] sm:$0xf] %v740
      %757 = vst [vmem:[%s201 + $0x1c] sm:$0xf] %v741
      %p758 = scmp.lt.s32.totalorder %s18, 1
      %s759 = scalar_select %p758, %s18, 1
      %p760 = scmp.lt.s32.totalorder %s19, 0
      %s761 = scalar_select %p760, %s19, 0
      %s762 = smul.addr %s759, 8
      %s763 = sadd.s32 %s761, %s762
      %s764 = smul.addr %s763, 4
      %s765 = scalar_lea.vmem %s3, %s764
      // Predicated region
      $region33: #{_lambda_.5} parent=31 // pred_check
        %p766 = pneg %p116
      $region34: #{_lambda_.5} parent=31 // pred_check_branch
        %768 = sbr.rel (%p766) target = $region36
      $region35: #{_lambda_.5} parent=31 // pred_region
        _
      $region36: #{_lambda_.5} parent=31 // pred_fallthru
        _
    $region32: #{_lambda_.5} parent=5 // pred_fallthru
      _
    %p769 = scmp.le.s32.totalorder 2, %s9
    // Predicated region
    $region37: #{_lambda_.5} parent=5 // pred_check
      %p770 = pneg %p769
    $region38: #{_lambda_.5} parent=5 // pred_check_branch
      %772 = sbr.rel (%p770) target = $region40
    $region39: #{_lambda_.5} parent=5 // pred_region
      %s773 = ssub.s32 %s9, 2
      // Predicated region
      $region41: #{_lambda_.5} parent=39 // pred_check
        %p774 = pneg %p122
      $region42: #{_lambda_.5} parent=39 // pred_check_branch
        %776 = sbr.rel (%p774) target = $region44
      $region43: #{_lambda_.5} parent=39 // pred_region
        %p777 = scmp.lt.s32.totalorder %s20, 1
        %s778 = scalar_select %p777, %s20, 1
        %p779 = scmp.lt.s32.totalorder %s21, 0
        %s780 = scalar_select %p779, %s21, 0
        %s781 = smul.addr %s778, 8
        %s782 = sadd.s32 %s780, %s781
        %s783 = smul.addr %s782, 4
        %s784 = scalar_lea.vmem %s3, %s783
      $region44: #{_lambda_.5} parent=39 // pred_fallthru
        _
    $region40: #{_lambda_.5} parent=5 // pred_fallthru
      _
  $region6: #{_lambda_.5} parent=0 // loop_footer
    %s13 = sadd.s32 1, %s9
  $region7: #{_lambda_.5} parent=0 // loop_footer_branch
    %8 = sbr.rel target = $region3
  $region8: #{_lambda_.5} parent=0 // loop_exit
    _

// kernel: _lambda_.6
$region0: #{_lambda_.6}
  #allocation0 [shape = 'u32[]', space=smem, size = 0x4, offset = 0x4, fixed_abs, tag = 'smem constant byte address 0x4 - core index']
  #allocation1 [shape = 'u32[144,128]{1,0:T(1,128)}', space=vmem, size = 0x12000, scoped, tag = 'internal scratch']
  %s0 = inlined_call_operand.vmem [shape: bf16[2,448,128], index: 0, kind: input, shape index: {}]
  %s1 = inlined_call_operand.vmem [shape: bf16[128,64], index: 1, kind: input, shape index: {}]
  %s2 = inlined_call_operand.vmem [shape: f32[128,1], index: 2, kind: input, shape index: {}]
  %s3 = inlined_call_operand.vmem [shape: bf16[2,128,128], index: 3, kind: output, shape index: {}]
  %s4 = sld [smem:[#allocation0]]
  $region45: #{_lambda_.6} parent=0
    _
  %s6 = ssub.s32 1, %s4
  %s7 = scalar_select 0, %s6, %s4
  loop: start=0, step=1, limit=4
  $region2: #{_lambda_.6} parent=0 // loop_pre_header
    _
  $region3: #{_lambda_.6} parent=0 // loop_header
    %s9 = sphi 0, %s13
    %p10 = scmp.ge.s32.totalorder %s9, 4
    %s16 = sphi 0, %s28
    %s17 = sphi 0, %s24
    %s18 = sphi 0, %s16
    %s19 = sphi 0, %s17
    %s20 = sphi 0, %s18
    %s21 = sphi 0, %s19
    %s33 = sphi 0, %s35
    %s36 = sphi 0, %s33
    %s37 = sphi 0, %s36
    %s53 = sphi 0, %s37
    %s57 = sphi 0, %s57
    %s59 = sphi 0, %s57
    %s60 = sphi 0, %s59
    %s74 = sphi 0, %s60
    %s78 = sphi 0, %s78
    %s80 = sphi 0, %s78
    %s81 = sphi 0, %s80
    %s95 = sphi 0, %s81
    %s103 = sphi 0, %s105
    %s106 = sphi 0, %s103
    %s107 = sphi 0, %s106
    %s123 = sphi 0, %s107
  $region4: #{_lambda_.6} parent=0 // loop_header_branch
    %12 = sbr.rel (%p10) target = $region8
  $region5: #{_lambda_.6} parent=0 // loop_body
    %s14 = ssub.s32 %s9, 1
    %s15 = ssub.s32 %s9, 2
    %s22 = sadd.s32 1, %s17
    %p23 = scmp.ge.s32.totalorder %s22, 1
    %s24 = scalar_select %p23, 0, %s22
    %s25 = sadd.s32 1, %s16
    %s26 = scalar_select %p23, %s25, %s16
    %p27 = scmp.ge.s32.totalorder %s26, 2
    %s28 = scalar_select %p27, 0, %s26
    %s29 = ssub.s32 %s16, %s28
    %s30 = ssub.s32 %s17, %s24
    %s31 = sor.u32 %s29, %s30
    %p32 = scmp.eq.s32.totalorder %s31, 0
    %s34 = sadd.s32 %s33, 1
    %s35 = scalar_select %p32, %s33, %s34
    %p38 = pneg %p32
    %p39 = scmp.eq.s32.totalorder %s9, 1
    %p40 = por %p38, %p39
    %p41 = scmp.ne.s32.totalorder %s33, %s36
    %p42 = scmp.eq.s32.totalorder %s9, 0
    %p43 = por %p41, %p42
    %p44 = scmp.ne.s32.totalorder %s33, %s36
    %p45 = scmp.eq.s32.totalorder %s14, 1
    %p46 = por %p44, %p45
    %p47 = scmp.ne.s32.totalorder %s36, %s37
    %p48 = scmp.eq.s32.totalorder %s14, 0
    %p49 = por %p47, %p48
    %p50 = scmp.ne.s32.totalorder %s36, %s37
    %p51 = scmp.eq.s32.totalorder %s15, 1
    %p52 = por %p50, %p51
    %p54 = scmp.ne.s32.totalorder %s37, %s53
    %p55 = scmp.eq.s32.totalorder %s15, 0
    %p56 = por %p54, %p55
    %s58 = sadd.s32 %s57, 1
    %p61 = scmp.eq.s32.totalorder %s9, 1
    %p62 = scmp.ne.s32.totalorder %s57, %s59
    %p63 = scmp.eq.s32.totalorder %s9, 0
    %p64 = por %p62, %p63
    %p65 = scmp.ne.s32.totalorder %s57, %s59
    %p66 = scmp.eq.s32.totalorder %s14, 1
    %p67 = por %p65, %p66
    %p68 = scmp.ne.s32.totalorder %s59, %s60
    %p69 = scmp.eq.s32.totalorder %s14, 0
    %p70 = por %p68, %p69
    %p71 = scmp.ne.s32.totalorder %s59, %s60
    %p72 = scmp.eq.s32.totalorder %s15, 1
    %p73 = por %p71, %p72
    %p75 = scmp.ne.s32.totalorder %s60, %s74
    %p76 = scmp.eq.s32.totalorder %s15, 0
    %p77 = por %p75, %p76
    %s79 = sadd.s32 %s78, 1
    %p82 = scmp.eq.s32.totalorder %s9, 1
    %p83 = scmp.ne.s32.totalorder %s78, %s80
    %p84 = scmp.eq.s32.totalorder %s9, 0
    %p85 = por %p83, %p84
    %p86 = scmp.ne.s32.totalorder %s78, %s80
    %p87 = scmp.eq.s32.totalorder %s14, 1
    %p88 = por %p86, %p87
    %p89 = scmp.ne.s32.totalorder %s80, %s81
    %p90 = scmp.eq.s32.totalorder %s14, 0
    %p91 = por %p89, %p90
    %p92 = scmp.ne.s32.totalorder %s80, %s81
    %p93 = scmp.eq.s32.totalorder %s15, 1
    %p94 = por %p92, %p93
    %p96 = scmp.ne.s32.totalorder %s81, %s95
    %p97 = scmp.eq.s32.totalorder %s15, 0
    %p98 = por %p96, %p97
    %s99 = ssub.s32 %s16, %s28
    %s100 = ssub.s32 %s17, %s24
    %s101 = sor.u32 %s99, %s100
    %p102 = scmp.eq.s32.totalorder %s101, 0
    %s104 = sadd.s32 %s103, 1
    %s105 = scalar_select %p102, %s103, %s104
    %p108 = pneg %p102
    %p109 = scmp.eq.s32.totalorder %s9, 1
    %p110 = por %p108, %p109
    %p111 = scmp.ne.s32.totalorder %s103, %s106
    %p112 = scmp.eq.s32.totalorder %s9, 0
    %p113 = por %p111, %p112
    %p114 = scmp.ne.s32.totalorder %s103, %s106
    %p115 = scmp.eq.s32.totalorder %s14, 1
    %p116 = por %p114, %p115
    %p117 = scmp.ne.s32.totalorder %s106, %s107
    %p118 = scmp.eq.s32.totalorder %s14, 0
    %p119 = por %p117, %p118
    %p120 = scmp.ne.s32.totalorder %s106, %s107
    %p121 = scmp.eq.s32.totalorder %s15, 1
    %p122 = por %p120, %p121
    %p124 = scmp.ne.s32.totalorder %s107, %s123
    %p125 = scmp.eq.s32.totalorder %s15, 0
    %p126 = por %p124, %p125
    %p127 = scmp.le.s32.totalorder 1, %s9
    %p128 = scmp.lt.s32.totalorder %s9, 3
    %p129 = pnand %p127, %p128
    %p130 = pneg %p129
    // Predicated region
    $region9: #{_lambda_.6} parent=5 // pred_check
      _
    $region10: #{_lambda_.6} parent=5 // pred_check_branch
      %132 = sbr.rel (%p129) target = $region12
    $region11: #{_lambda_.6} parent=5 // pred_region
      %s133 = ssub.s32 %s9, 1
      // Predicated region
      $region13: #{_lambda_.6} parent=11 // pred_check
        %p134 = pneg %p70
      $region14: #{_lambda_.6} parent=11 // pred_check_branch
        %136 = sbr.rel (%p134) target = $region16
      $region15: #{_lambda_.6} parent=11 // pred_region
        _
      $region16: #{_lambda_.6} parent=11 // pred_fallthru
        _
      // Predicated region
      $region17: #{_lambda_.6} parent=11 // pred_check
        %p137 = pneg %p91
      $region18: #{_lambda_.6} parent=11 // pred_check_branch
        %139 = sbr.rel (%p137) target = $region20
      $region19: #{_lambda_.6} parent=11 // pred_region
        _
      $region20: #{_lambda_.6} parent=11 // pred_fallthru
        _
    $region12: #{_lambda_.6} parent=5 // pred_fallthru
      _
    %p140 = scmp.lt.s32.totalorder %s9, 2
    // Predicated region
    $region21: #{_lambda_.6} parent=5 // pred_check
      %p141 = pneg %p140
    $region22: #{_lambda_.6} parent=5 // pred_check_branch
      %143 = sbr.rel (%p141) target = $region24
    $region23: #{_lambda_.6} parent=5 // pred_region
      // Predicated region
      $region25: #{_lambda_.6} parent=23 // pred_check
        %p144 = pneg %p43
      $region26: #{_lambda_.6} parent=23 // pred_check_branch
        %146 = sbr.rel (%p144) target = $region28
      $region27: #{_lambda_.6} parent=23 // pred_region
        %p147 = scmp.lt.s32.totalorder %s16, 1
        %s148 = scalar_select %p147, %s16, 1
        %p149 = scmp.lt.s32.totalorder %s17, 0
        %s150 = scalar_select %p149, %s17, 0
        %s151 = smul.addr %s148, 56
        %s152 = sadd.s32 %s150, %s151
        %s153 = smul.addr %s152, 4
        %s154 = scalar_lea.vmem %s0, %s153
      $region28: #{_lambda_.6} parent=23 // pred_fallthru
        _
    $region24: #{_lambda_.6} parent=5 // pred_fallthru
      _
    %p155 = scmp.le.s32.totalorder 1, %s9
    %p156 = scmp.lt.s32.totalorder %s9, 3
    %p157 = pnand %p155, %p156
    %p158 = pneg %p157
    // Predicated region
    $region29: #{_lambda_.6} parent=5 // pred_check
      _
    $region30: #{_lambda_.6} parent=5 // pred_check_branch
      %160 = sbr.rel (%p157) target = $region32
    $region31: #{_lambda_.6} parent=5 // pred_region
      %s161 = ssub.s32 %s9, 1
      %p162 = scmp.lt.s32.totalorder %s18, 1
      %s163 = scalar_select %p162, %s18, 1
      %p164 = scmp.lt.s32.totalorder %s19, 0
      %s165 = scalar_select %p164, %s19, 0
      %s166 = smul.addr %s163, 56
      %s167 = sadd.s32 %s165, %s166
      %s168 = smul.addr %s167, 4
      %s169 = scalar_lea.vmem %s0, %s168
      %p170 = pneg %p49
      %p171 = pneg %p46
      %p172 = pneg %p70
      %p173 = pneg %p67
      %p174 = pneg %p91
      %p175 = pneg %p88
      %p176 = pneg %p119
      %p177 = pneg %p116
      %p178 = scmp.lt.s32.totalorder %s18, 1
      %s179 = scalar_select %p178, %s18, 1
      %p180 = scmp.lt.s32.totalorder %s19, 0
      %s181 = scalar_select %p180, %s19, 0
      %s182 = smul.addr %s179, 16
      %s183 = sadd.s32 %s181, %s182
      %s184 = smul.addr %s183, 4
      %s185 = scalar_lea.vmem %s3, %s184
      %p186 = scmp.lt.s32.totalorder %s18, 1
      %s187 = scalar_select %p186, %s18, 1
      %p188 = scmp.lt.s32.totalorder %s19, 0
      %s189 = scalar_select %p188, %s19, 0
      %s190 = smul.addr %s187, 56
      %s191 = sadd.s32 %s189, %s190
      %s192 = smul.addr %s191, 4
      %s193 = scalar_lea.vmem %s0, %s192
      %p194 = scmp.lt.s32.totalorder %s18, 1
      %s195 = scalar_select %p194, %s18, 1
      %p196 = scmp.lt.s32.totalorder %s19, 0
      %s197 = scalar_select %p196, %s19, 0
      %s198 = smul.addr %s195, 16
      %s199 = sadd.s32 %s197, %s198
      %s200 = smul.addr %s199, 4
      %s201 = scalar_lea.vmem %s3, %s200
      %v203 = vld [vmem:[%s193] sm:$0xf]
      %v204 = vld [vmem:[%s193 + $0x4] sm:$0xf]
      %v205 = vld [vmem:[%s193 + $0x8] sm:$0xf]
      %v206 = vld [vmem:[%s193 + $0xc] sm:$0xf]
      %v207 = vld [vmem:[%s193 + $0x10] sm:$0xf]
      %v208 = vld [vmem:[%s193 + $0x14] sm:$0xf]
      %v209 = vld [vmem:[%s193 + $0x18] sm:$0xf]
      %v210 = vld [vmem:[%s193 + $0x1c] sm:$0xf]
      %v211 = vld [vmem:[%s193 + $0x20] sm:$0xf]
      %v212 = vld [vmem:[%s193 + $0x24] sm:$0xf]
      %v213 = vld [vmem:[%s193 + $0x28] sm:$0xf]
      %v214 = vld [vmem:[%s193 + $0x2c] sm:$0xf]
      %v215 = vld [vmem:[%s193 + $0x30] sm:$0xf]
      %v216 = vld [vmem:[%s193 + $0x34] sm:$0xf]
      %v217 = vld [vmem:[%s193 + $0x38] sm:$0xf]
      %v218 = vld [vmem:[%s193 + $0x3c] sm:$0xf]
      %v219 = vld [vmem:[%s193 + $0x40] sm:$0xf]
      %v220 = vld [vmem:[%s193 + $0x44] sm:$0xf]
      %v221 = vld [vmem:[%s193 + $0x48] sm:$0xf]
      %v222 = vld [vmem:[%s193 + $0x4c] sm:$0xf]
      %v223 = vld [vmem:[%s193 + $0x50] sm:$0xf]
      %v224 = vld [vmem:[%s193 + $0x54] sm:$0xf]
      %v225 = vld [vmem:[%s193 + $0x58] sm:$0xf]
      %v226 = vld [vmem:[%s193 + $0x5c] sm:$0xf]
      %v227 = vld [vmem:[%s193 + $0x60] sm:$0xf]
      %v228 = vld [vmem:[%s193 + $0x64] sm:$0xf]
      %v229 = vld [vmem:[%s193 + $0x68] sm:$0xf]
      %v230 = vld [vmem:[%s193 + $0x6c] sm:$0xf]
      %v231 = vld [vmem:[%s193 + $0x70] sm:$0xf]
      %v232 = vld [vmem:[%s193 + $0x74] sm:$0xf]
      %v233 = vld [vmem:[%s193 + $0x78] sm:$0xf]
      %v234 = vld [vmem:[%s193 + $0x7c] sm:$0xf]
      %v235 = vld [vmem:[%s193 + $0x80] sm:$0xf]
      %v236 = vld [vmem:[%s193 + $0x84] sm:$0xf]
      %v237 = vld [vmem:[%s193 + $0x88] sm:$0xf]
      %v238 = vld [vmem:[%s193 + $0x8c] sm:$0xf]
      %v239 = vld [vmem:[%s193 + $0x90] sm:$0xf]
      %v240 = vld [vmem:[%s193 + $0x94] sm:$0xf]
      %v241 = vld [vmem:[%s193 + $0x98] sm:$0xf]
      %v242 = vld [vmem:[%s193 + $0x9c] sm:$0xf]
      %v243 = vld [vmem:[%s193 + $0xa0] sm:$0xf]
      %v244 = vld [vmem:[%s193 + $0xa4] sm:$0xf]
      %v245 = vld [vmem:[%s193 + $0xa8] sm:$0xf]
      %v246 = vld [vmem:[%s193 + $0xac] sm:$0xf]
      %v247 = vld [vmem:[%s193 + $0xb0] sm:$0xf]
      %v248 = vld [vmem:[%s193 + $0xb4] sm:$0xf]
      %v249 = vld [vmem:[%s193 + $0xb8] sm:$0xf]
      %v250 = vld [vmem:[%s193 + $0xbc] sm:$0xf]
      %v251 = vld [vmem:[%s193 + $0xc0] sm:$0xf]
      %v252 = vld [vmem:[%s193 + $0xc4] sm:$0xf]
      %v253 = vld [vmem:[%s193 + $0xc8] sm:$0xf]
      %v254 = vld [vmem:[%s193 + $0xcc] sm:$0xf]
      %v255 = vld [vmem:[%s193 + $0xd0] sm:$0xf]
      %v256 = vld [vmem:[%s193 + $0xd4] sm:$0xf]
      %v257 = vld [vmem:[%s193 + $0xd8] sm:$0xf]
      %v258 = vld [vmem:[%s193 + $0xdc] sm:$0xf]
      %v259 = vmax.bf16 %v203, %v211
      %v260 = vmax.bf16 %v204, %v212
      %v261 = vmax.bf16 %v205, %v213
      %v262 = vmax.bf16 %v206, %v214
      %v263 = vmax.bf16 %v207, %v215
      %v264 = vmax.bf16 %v208, %v216
      %v265 = vmax.bf16 %v209, %v217
      %v266 = vmax.bf16 %v210, %v218
      %v267 = vmax.bf16 %v259, %v219
      %v268 = vmax.bf16 %v260, %v220
      %v269 = vmax.bf16 %v261, %v221
      %v270 = vmax.bf16 %v262, %v222
      %v271 = vmax.bf16 %v263, %v223
      %v272 = vmax.bf16 %v264, %v224
      %v273 = vmax.bf16 %v265, %v225
      %v274 = vmax.bf16 %v266, %v226
      %v275 = vmax.bf16 %v267, %v227
      %v276 = vmax.bf16 %v268, %v228
      %v277 = vmax.bf16 %v269, %v229
      %v278 = vmax.bf16 %v270, %v230
      %v279 = vmax.bf16 %v271, %v231
      %v280 = vmax.bf16 %v272, %v232
      %v281 = vmax.bf16 %v273, %v233
      %v282 = vmax.bf16 %v274, %v234
      %v283 = vmax.bf16 %v275, %v235
      %v284 = vmax.bf16 %v276, %v236
      %v285 = vmax.bf16 %v277, %v237
      %v286 = vmax.bf16 %v278, %v238
      %v287 = vmax.bf16 %v279, %v239
      %v288 = vmax.bf16 %v280, %v240
      %v289 = vmax.bf16 %v281, %v241
      %v290 = vmax.bf16 %v282, %v242
      %v291 = vmax.bf16 %v283, %v243
      %v292 = vmax.bf16 %v284, %v244
      %v293 = vmax.bf16 %v285, %v245
      %v294 = vmax.bf16 %v286, %v246
      %v295 = vmax.bf16 %v287, %v247
      %v296 = vmax.bf16 %v288, %v248
      %v297 = vmax.bf16 %v289, %v249
      %v298 = vmax.bf16 %v290, %v250
      %v299 = vmax.bf16 %v291, %v251
      %v300 = vmax.bf16 %v292, %v252
      %v301 = vmax.bf16 %v293, %v253
      %v302 = vmax.bf16 %v294, %v254
      %v303 = vmax.bf16 %v295, %v255
      %v304 = vmax.bf16 %v296, %v256
      %v305 = vmax.bf16 %v297, %v257
      %v306 = vmax.bf16 %v298, %v258
      %v307 = vld [vmem:[%s1] sm:$0xf]
      %v308 = vld [vmem:[%s1 + $0x4] sm:$0xf]
      %v309 = vld [vmem:[%s1 + $0x8] sm:$0xf]
      %v310 = vld [vmem:[%s1 + $0xc] sm:$0xf]
      %v311 = vld [vmem:[%s1 + $0x10] sm:$0xf]
      %v312 = vld [vmem:[%s1 + $0x14] sm:$0xf]
      %v313 = vld [vmem:[%s1 + $0x18] sm:$0xf]
      %v314 = vld [vmem:[%s1 + $0x1c] sm:$0xf]
      %v315 = vld [vmem:[%s1 + $0x20] sm:$0xf]
      %v316 = vld [vmem:[%s1 + $0x24] sm:$0xf]
      %v317 = vld [vmem:[%s1 + $0x28] sm:$0xf]
      %v318 = vld [vmem:[%s1 + $0x2c] sm:$0xf]
      %v319 = vld [vmem:[%s1 + $0x30] sm:$0xf]
      %v320 = vld [vmem:[%s1 + $0x34] sm:$0xf]
      %v321 = vld [vmem:[%s1 + $0x38] sm:$0xf]
      %v322 = vld [vmem:[%s1 + $0x3c] sm:$0xf]
      %v323 = vld [vmem:[%s2] sm:$0xff]
      %v324 = vld [vmem:[%s2 + $0x8] sm:$0xff]
      %v325 = vld [vmem:[%s2 + $0x10] sm:$0xff]
      %v326 = vld [vmem:[%s2 + $0x18] sm:$0xff]
      %v327 = vld [vmem:[%s2 + $0x20] sm:$0xff]
      %v328 = vld [vmem:[%s2 + $0x28] sm:$0xff]
      %v329 = vld [vmem:[%s2 + $0x30] sm:$0xff]
      %v330 = vld [vmem:[%s2 + $0x38] sm:$0xff]
      %v331 = vld [vmem:[%s2 + $0x40] sm:$0xff]
      %v332 = vld [vmem:[%s2 + $0x48] sm:$0xff]
      %v333 = vld [vmem:[%s2 + $0x50] sm:$0xff]
      %v334 = vld [vmem:[%s2 + $0x58] sm:$0xff]
      %v335 = vld [vmem:[%s2 + $0x60] sm:$0xff]
      %v336 = vld [vmem:[%s2 + $0x68] sm:$0xff]
      %v337 = vld [vmem:[%s2 + $0x70] sm:$0xff]
      %v338 = vld [vmem:[%s2 + $0x78] sm:$0xff]
      %340 = vset.pattern.permute.xlu0 0
      %341 = vperm.xlu0 %340, %v323
      %v342 = vpop.permute.xlu0 %341
      %345 = vset.pattern.permute.xlu0 0
      %346 = vperm.xlu0 %345, %v324
      %v347 = vpop.permute.xlu0 %346
      %350 = vset.pattern.permute.xlu0 0
      %351 = vperm.xlu0 %350, %v325
      %v352 = vpop.permute.xlu0 %351
      %355 = vset.pattern.permute.xlu0 0
      %356 = vperm.xlu0 %355, %v326
      %v357 = vpop.permute.xlu0 %356
      %360 = vset.pattern.permute.xlu0 0
      %361 = vperm.xlu0 %360, %v327
      %v362 = vpop.permute.xlu0 %361
      %365 = vset.pattern.permute.xlu0 0
      %366 = vperm.xlu0 %365, %v328
      %v367 = vpop.permute.xlu0 %366
      %370 = vset.pattern.permute.xlu0 0
      %371 = vperm.xlu0 %370, %v329
      %v372 = vpop.permute.xlu0 %371
      %375 = vset.pattern.permute.xlu0 0
      %376 = vperm.xlu0 %375, %v330
      %v377 = vpop.permute.xlu0 %376
      %380 = vset.pattern.permute.xlu0 0
      %381 = vperm.xlu0 %380, %v331
      %v382 = vpop.permute.xlu0 %381
      %385 = vset.pattern.permute.xlu0 0
      %386 = vperm.xlu0 %385, %v332
      %v387 = vpop.permute.xlu0 %386
      %390 = vset.pattern.permute.xlu0 0
      %391 = vperm.xlu0 %390, %v333
      %v392 = vpop.permute.xlu0 %391
      %395 = vset.pattern.permute.xlu0 0
      %396 = vperm.xlu0 %395, %v334
      %v397 = vpop.permute.xlu0 %396
      %400 = vset.pattern.permute.xlu0 0
      %401 = vperm.xlu0 %400, %v335
      %v402 = vpop.permute.xlu0 %401
      %405 = vset.pattern.permute.xlu0 0
      %406 = vperm.xlu0 %405, %v336
      %v407 = vpop.permute.xlu0 %406
      %410 = vset.pattern.permute.xlu0 0
      %411 = vperm.xlu0 %410, %v337
      %v412 = vpop.permute.xlu0 %411
      %415 = vset.pattern.permute.xlu0 0
      %416 = vperm.xlu0 %415, %v338
      %v417 = vpop.permute.xlu0 %416
      %v435 = vunpack.c.l.b16 %v307
      %v436 = vunpack.c.l.b16 %v308
      %v437 = vunpack.c.l.b16 %v309
      %v438 = vunpack.c.l.b16 %v310
      %v439 = vunpack.c.l.b16 %v311
      %v440 = vunpack.c.l.b16 %v312
      %v441 = vunpack.c.l.b16 %v313
      %v442 = vunpack.c.l.b16 %v314
      %v443 = vunpack.c.l.b16 %v315
      %v444 = vunpack.c.l.b16 %v316
      %v445 = vunpack.c.l.b16 %v317
      %v446 = vunpack.c.l.b16 %v318
      %v447 = vunpack.c.l.b16 %v319
      %v448 = vunpack.c.l.b16 %v320
      %v449 = vunpack.c.l.b16 %v321
      %v450 = vunpack.c.l.b16 %v322
      %v451 = vpack.c.b16 %v436, %v435
      %v452 = vpack.c.b16 %v438, %v437
      %v453 = vpack.c.b16 %v440, %v439
      %v454 = vpack.c.b16 %v442, %v441
      %v455 = vpack.c.b16 %v444, %v443
      %v456 = vpack.c.b16 %v446, %v445
      %v457 = vpack.c.b16 %v448, %v447
      %v458 = vpack.c.b16 %v450, %v449
      %v467 = vunpack.c.l.b16 %v299
      %v468 = vunpack.c.l.b16 %v300
      %v469 = vunpack.c.l.b16 %v301
      %v470 = vunpack.c.l.b16 %v302
      %v471 = vunpack.c.l.b16 %v303
      %v472 = vunpack.c.l.b16 %v304
      %v473 = vunpack.c.l.b16 %v305
      %v474 = vunpack.c.l.b16 %v306
      %v475 = vpack.c.b16 %v468, %v467
      %v476 = vpack.c.b16 %v470, %v469
      %v477 = vpack.c.b16 %v472, %v471
      %v478 = vpack.c.b16 %v474, %v473
      %vm483 = vcmask 523264
      %v485 = vsel %vm483, %v451, 0
      %v488 = vsel %vm483, %v452, 0
      %v491 = vsel %vm483, %v453, 0
      %v494 = vsel %vm483, %v454, 0
      %v497 = vsel %vm483, %v455, 0
      %v500 = vsel %vm483, %v456, 0
      %v503 = vsel %vm483, %v457, 0
      %v506 = vsel %vm483, %v458, 0
      %508 = vmatprep.subr.bf16.mxu0 0
      %509 = vmatpush1.bf16.msra.mxu0 0
      %510 = vmatprep.subr.bf16.mxu0 0
      %511 = vmatpush1.bf16.msra.mxu0 0
      %512 = vmatprep.subr.bf16.mxu0 0
      %513 = vmatpush1.bf16.msra.mxu0 0
      %514 = vmatprep.subr.bf16.mxu0 0
      %515 = vmatpush1.bf16.msra.mxu0 0
      %516 = vmatprep.subr.bf16.mxu0 0
      %517 = vmatpush1.bf16.msra.mxu0 %v478
      %518 = vmatprep.subr.bf16.mxu0 0
      %519 = vmatpush1.bf16.msra.mxu0 %v477
      %520 = vmatprep.subr.bf16.mxu0 0
      %521 = vmatpush1.bf16.msra.mxu0 %v476
      %522 = vmatprep.subr.bf16.mxu0 0
      %523 = vmatpush1.bf16.msra.mxu0 %v475
      %524 = vmatprep.subr.bf16.mxu0 0
      %525 = vmatpush2.bf16.msra.mxu0 0
      %526 = vmatprep.subr.bf16.mxu0 0
      %527 = vmatpush2.bf16.msra.mxu0 0
      %528 = vmatprep.subr.bf16.mxu0 0
      %529 = vmatpush2.bf16.msra.mxu0 0
      %530 = vmatprep.subr.bf16.mxu0 0
      %531 = vmatpush2.bf16.msra.mxu0 0
      %532 = vmatprep.subr.bf16.mxu0 0
      %533 = vmatpush2.bf16.msra.mxu0 0
      %534 = vmatprep.subr.bf16.mxu0 0
      %535 = vmatpush2.bf16.msra.mxu0 0
      %536 = vmatprep.subr.bf16.mxu0 0
      %537 = vmatpush2.bf16.msra.mxu0 0
      %538 = vmatprep.subr.bf16.mxu0 0
      %539 = vmatpush2.bf16.msra.mxu0 0
      %540 = vmatprep.mubr.bf16.mxu0 0
      %541 = vmatmul.mubr.bf16.gmra.mxu0 %v485
      %v542 = vpop.f32.mrf.mxu0
      %v543 = vadd.f32 %v342, %v542
      %v544 = vpop.f32.mrf.mxu0
      %v545 = vpop.f32.mrf.mxu0
      %v546 = vadd.f32 %v347, %v545
      %v547 = vpop.f32.mrf.mxu0
      %548 = vmatprep.mubr.bf16.mxu0 0
      %549 = vmatmul.mubr.bf16.gmra.mxu0 %v488
      %v550 = vpop.f32.mrf.mxu0
      %v551 = vadd.f32 %v352, %v550
      %v552 = vpop.f32.mrf.mxu0
      %v553 = vpop.f32.mrf.mxu0
      %v554 = vadd.f32 %v357, %v553
      %v555 = vpop.f32.mrf.mxu0
      %556 = vmatprep.mubr.bf16.mxu0 0
      %557 = vmatmul.mubr.bf16.gmra.mxu0 %v491
      %v558 = vpop.f32.mrf.mxu0
      %v559 = vadd.f32 %v362, %v558
      %v560 = vpop.f32.mrf.mxu0
      %v561 = vpop.f32.mrf.mxu0
      %v562 = vadd.f32 %v367, %v561
      %v563 = vpop.f32.mrf.mxu0
      %564 = vmatprep.mubr.bf16.mxu0 0
      %565 = vmatmul.mubr.bf16.gmra.mxu0 %v494
      %v566 = vpop.f32.mrf.mxu0
      %v567 = vadd.f32 %v372, %v566
      %v568 = vpop.f32.mrf.mxu0
      %v569 = vpop.f32.mrf.mxu0
      %v570 = vadd.f32 %v377, %v569
      %v571 = vpop.f32.mrf.mxu0
      %572 = vmatprep.mubr.bf16.mxu0 0
      %573 = vmatmul.mubr.bf16.gmra.mxu0 %v497
      %v574 = vpop.f32.mrf.mxu0
      %v575 = vadd.f32 %v382, %v574
      %v576 = vpop.f32.mrf.mxu0
      %v577 = vpop.f32.mrf.mxu0
      %v578 = vadd.f32 %v387, %v577
      %v579 = vpop.f32.mrf.mxu0
      %580 = vmatprep.mubr.bf16.mxu0 0
      %581 = vmatmul.mubr.bf16.gmra.mxu0 %v500
      %v582 = vpop.f32.mrf.mxu0
      %v583 = vadd.f32 %v392, %v582
      %v584 = vpop.f32.mrf.mxu0
      %v585 = vpop.f32.mrf.mxu0
      %v586 = vadd.f32 %v397, %v585
      %v587 = vpop.f32.mrf.mxu0
      %588 = vmatprep.mubr.bf16.mxu0 0
      %589 = vmatmul.mubr.bf16.gmra.mxu0 %v503
      %v590 = vpop.f32.mrf.mxu0
      %v591 = vadd.f32 %v402, %v590
      %v592 = vpop.f32.mrf.mxu0
      %v593 = vpop.f32.mrf.mxu0
      %v594 = vadd.f32 %v407, %v593
      %v595 = vpop.f32.mrf.mxu0
      %596 = vmatprep.mubr.bf16.mxu0 0
      %597 = vmatmul.mubr.bf16.gmra.mxu0 %v506
      %v598 = vpop.f32.mrf.mxu0
      %v599 = vadd.f32 %v412, %v598
      %v600 = vpop.f32.mrf.mxu0
      %v601 = vpop.f32.mrf.mxu0
      %v602 = vadd.f32 %v417, %v601
      %v603 = vpop.f32.mrf.mxu0
      %604 = vdwg.mxu0
      %v605 = vmax.f32 %v543, 0.0
      %v606 = vmax.f32 %v546, 0.0
      %v607 = vmax.f32 %v551, 0.0
      %v608 = vmax.f32 %v554, 0.0
      %v609 = vmax.f32 %v559, 0.0
      %v610 = vmax.f32 %v562, 0.0
      %v611 = vmax.f32 %v567, 0.0
      %v612 = vmax.f32 %v570, 0.0
      %v613 = vmax.f32 %v575, 0.0
      %v614 = vmax.f32 %v578, 0.0
      %v615 = vmax.f32 %v583, 0.0
      %v616 = vmax.f32 %v586, 0.0
      %v617 = vmax.f32 %v591, 0.0
      %v618 = vmax.f32 %v594, 0.0
      %v619 = vmax.f32 %v599, 0.0
      %v620 = vmax.f32 %v602, 0.0
      %v621 = vpack.c.bf16 %v606, %v605
      %v622 = vpack.c.bf16 %v608, %v607
      %v623 = vpack.c.bf16 %v610, %v609
      %v624 = vpack.c.bf16 %v612, %v611
      %v625 = vpack.c.bf16 %v614, %v613
      %v626 = vpack.c.bf16 %v616, %v615
      %v627 = vpack.c.bf16 %v618, %v617
      %v628 = vpack.c.bf16 %v620, %v619
      %v637 = vunpack.c.l.b16 %v621
      %v638 = vunpack.c.h.b16 %v621
      %v639 = vunpack.c.l.b16 %v622
      %v640 = vunpack.c.h.b16 %v622
      %v641 = vunpack.c.l.b16 %v623
      %v642 = vunpack.c.h.b16 %v623
      %v643 = vunpack.c.l.b16 %v624
      %v644 = vunpack.c.h.b16 %v624
      %v645 = vunpack.c.l.b16 %v625
      %v646 = vunpack.c.h.b16 %v625
      %v647 = vunpack.c.l.b16 %v626
      %v648 = vunpack.c.h.b16 %v626
      %v649 = vunpack.c.l.b16 %v627
      %v650 = vunpack.c.h.b16 %v627
      %v651 = vunpack.c.l.b16 %v628
      %v652 = vunpack.c.h.b16 %v628
      %v653 = vpack.c.b16 %v637, %v637
      %v654 = vpack.c.b16 %v638, %v638
      %v655 = vpack.c.b16 %v639, %v639
      %v656 = vpack.c.b16 %v640, %v640
      %v657 = vpack.c.b16 %v641, %v641
      %v658 = vpack.c.b16 %v642, %v642
      %v659 = vpack.c.b16 %v643, %v643
      %v660 = vpack.c.b16 %v644, %v644
      %v661 = vpack.c.b16 %v645, %v645
      %v662 = vpack.c.b16 %v646, %v646
      %v663 = vpack.c.b16 %v647, %v647
      %v664 = vpack.c.b16 %v648, %v648
      %v665 = vpack.c.b16 %v649, %v649
      %v666 = vpack.c.b16 %v650, %v650
      %v667 = vpack.c.b16 %v651, %v651
      %v668 = vpack.c.b16 %v652, %v652
      %685 = vst [vmem:[%s201] sm:$0xf] %v653
      %686 = vst [vmem:[%s201 + $0x4] sm:$0xf] %v654
      %687 = vst [vmem:[%s201 + $0x8] sm:$0xf] %v655
      %688 = vst [vmem:[%s201 + $0xc] sm:$0xf] %v656
      %689 = vst [vmem:[%s201 + $0x10] sm:$0xf] %v657
      %690 = vst [vmem:[%s201 + $0x14] sm:$0xf] %v658
      %691 = vst [vmem:[%s201 + $0x18] sm:$0xf] %v659
      %692 = vst [vmem:[%s201 + $0x1c] sm:$0xf] %v660
      %693 = vst [vmem:[%s201 + $0x20] sm:$0xf] %v661
      %694 = vst [vmem:[%s201 + $0x24] sm:$0xf] %v662
      %695 = vst [vmem:[%s201 + $0x28] sm:$0xf] %v663
      %696 = vst [vmem:[%s201 + $0x2c] sm:$0xf] %v664
      %697 = vst [vmem:[%s201 + $0x30] sm:$0xf] %v665
      %698 = vst [vmem:[%s201 + $0x34] sm:$0xf] %v666
      %699 = vst [vmem:[%s201 + $0x38] sm:$0xf] %v667
      %700 = vst [vmem:[%s201 + $0x3c] sm:$0xf] %v668
      %p701 = scmp.lt.s32.totalorder %s18, 1
      %s702 = scalar_select %p701, %s18, 1
      %p703 = scmp.lt.s32.totalorder %s19, 0
      %s704 = scalar_select %p703, %s19, 0
      %s705 = smul.addr %s702, 16
      %s706 = sadd.s32 %s704, %s705
      %s707 = smul.addr %s706, 4
      %s708 = scalar_lea.vmem %s3, %s707
      // Predicated region
      $region33: #{_lambda_.6} parent=31 // pred_check
        %p709 = pneg %p116
      $region34: #{_lambda_.6} parent=31 // pred_check_branch
        %711 = sbr.rel (%p709) target = $region36
      $region35: #{_lambda_.6} parent=31 // pred_region
        _
      $region36: #{_lambda_.6} parent=31 // pred_fallthru
        _
    $region32: #{_lambda_.6} parent=5 // pred_fallthru
      _
    %p712 = scmp.le.s32.totalorder 2, %s9
    // Predicated region
    $region37: #{_lambda_.6} parent=5 // pred_check
      %p713 = pneg %p712
    $region38: #{_lambda_.6} parent=5 // pred_check_branch
      %715 = sbr.rel (%p713) target = $region40
    $region39: #{_lambda_.6} parent=5 // pred_region
      %s716 = ssub.s32 %s9, 2
      // Predicated region
      $region41: #{_lambda_.6} parent=39 // pred_check
        %p717 = pneg %p122
      $region42: #{_lambda_.6} parent=39 // pred_check_branch
        %719 = sbr.rel (%p717) target = $region44
      $region43: #{_lambda_.6} parent=39 // pred_region
        %p720 = scmp.lt.s32.totalorder %s20, 1
        %s721 = scalar_select %p720, %s20, 1
        %p722 = scmp.lt.s32.totalorder %s21, 0
        %s723 = scalar_select %p722, %s21, 0
        %s724 = smul.addr %s721, 16
        %s725 = sadd.s32 %s723, %s724
        %s726 = smul.addr %s725, 4
        %s727 = scalar_lea.vmem %s3, %s726
      $region44: #{_lambda_.6} parent=39 // pred_fallthru
        _
    $region40: #{_lambda_.6} parent=5 // pred_fallthru
      _
  $region6: #{_lambda_.6} parent=0 // loop_footer
    %s13 = sadd.s32 1, %s9
  $region7: #{_lambda_.6} parent=0 // loop_footer_branch
    %8 = sbr.rel target = $region3
  $region8: #{_lambda_.6} parent=0 // loop_exit
    _

// kernel: _lambda_.7
$region0: #{_lambda_.7}
  #allocation0 [shape = 'u32[]', space=smem, size = 0x4, offset = 0x4, fixed_abs, tag = 'smem constant byte address 0x4 - core index']
  #allocation1 [shape = 'u32[144,128]{1,0:T(1,128)}', space=vmem, size = 0x12000, scoped, tag = 'internal scratch']
  #allocation2 [shape = 'f32[2,4]{1,0:T(2,128)}', space=vmem, size = 0x400, scoped, tag = 'scratch operand']
  %s0 = inlined_call_operand.vmem [shape: bf16[2,2048], index: 0, kind: input, shape index: {}]
  %s1 = inlined_call_operand.vmem [shape: f32[4,2048], index: 1, kind: input, shape index: {}]
  %s2 = inlined_call_operand.vmem [shape: f32[1,4], index: 2, kind: input, shape index: {}]
  %s3 = inlined_call_operand.hbm [shape: f32[2,4], index: 3, kind: output, shape index: {}]
  %s4 = sld [smem:[#allocation0]]
  $region30: #{_lambda_.7} parent=0
    _
  %s6 = ssub.s32 1, %s4
  %s7 = scalar_select 0, %s6, %s4
  $region1: #{_lambda_.7} parent=0
    #allocation3 [shape = 'u8[1024]{0}', space=vmem, size = 0x400, scoped, tag = 'output window, operand 0, single buffered']
    #allocation4 [shape = 's32[1]{0}', space=sflag, size = 0x4, scoped, tag = 'scoped memory for _lambda_.7']
    %8 = vsyncpa [#allocation4], 0
    // Predicated region
    $region2: #{_lambda_.7} parent=1 // pred_check
      _
    $region3: #{_lambda_.7} parent=1 // pred_check_branch
      %10 = sbr.rel (0) target = $region5
    $region4: #{_lambda_.7} parent=1 // pred_region
      _
    $region5: #{_lambda_.7} parent=1 // pred_fallthru
      _
    // Predicated region
    $region6: #{_lambda_.7} parent=1 // pred_check
      _
    $region7: #{_lambda_.7} parent=1 // pred_check_branch
      %12 = sbr.rel (0) target = $region9
    $region8: #{_lambda_.7} parent=1 // pred_region
      _
    $region9: #{_lambda_.7} parent=1 // pred_fallthru
      _
    // Predicated region
    $region10: #{_lambda_.7} parent=1 // pred_check
      _
    $region11: #{_lambda_.7} parent=1 // pred_check_branch
      %14 = sbr.rel (0) target = $region13
    $region12: #{_lambda_.7} parent=1 // pred_region
      _
    $region13: #{_lambda_.7} parent=1 // pred_fallthru
      _
    %p15 = scmp.eq.s32.totalorder 0, 0
    // Predicated region
    $region14: #{_lambda_.7} parent=1 // pred_check
      %p16 = pneg %p15
    $region15: #{_lambda_.7} parent=1 // pred_check_branch
      %18 = sbr.rel (%p16) target = $region17
    $region16: #{_lambda_.7} parent=1 // pred_region
      %vm19 = vcmask 25600
      %20 = vst.msk [vmem:[#allocation2] sm:$0x3] %vm19, 0.0
    $region17: #{_lambda_.7} parent=1 // pred_fallthru
      _
    %v21 = vld [vmem:[%s0] sm:$0xff]
    %v22 = vld [vmem:[%s0 + $0x8] sm:$0xff]
    %v23 = vunpack.c.l.bf16 %v21
    %v24 = vunpack.c.h.bf16 %v21
    %v25 = vunpack.c.l.bf16 %v22
    %v26 = vunpack.c.h.bf16 %v22
    %v27 = vld [vmem:[%s1] sm:$0xff]
    %v28 = vld [vmem:[%s1 + $0x8] sm:$0xff]
    %v29 = vld [vmem:[%s1 + $0x10] sm:$0xff]
    %v30 = vld [vmem:[%s1 + $0x18] sm:$0xff]
    %v31 = vld [vmem:[%s1 + $0x20] sm:$0xff]
    %v32 = vld [vmem:[%s1 + $0x28] sm:$0xff]
    %v33 = vld [vmem:[%s1 + $0x30] sm:$0xff]
    %v34 = vld [vmem:[%s1 + $0x38] sm:$0xff]
    %v35 = vld [vmem:[#allocation2] sm:$0x3]
    %v40 = vcombine.high %v23, %v23
    %v42 = vunpack.c.l.s4 1983009808
    %v43 = vunpack.c.0.s8 %v42
    %v44 = vlaneseq
    %v45 = vshrl.u32 %v44, 7
    %v46 = vsub.s32 %v43, %v45
    %v47 = vrot.slane %v23, %v46
    %v49 = vunpack.c.l.s4 1983009808
    %v50 = vunpack.c.0.s8 %v49
    %v51 = vlaneseq
    %v52 = vshrl.u32 %v51, 7
    %v53 = vsub.s32 %v50, %v52
    %v54 = vrot.slane %v40, %v53
    %v55 = vcombine.high %v47, %v47
    %v56 = vcombine.high %v54, %v54
    %v57 = vcombine.high %v24, %v24
    %v59 = vunpack.c.l.s4 1983009808
    %v60 = vunpack.c.0.s8 %v59
    %v61 = vlaneseq
    %v62 = vshrl.u32 %v61, 7
    %v63 = vsub.s32 %v60, %v62
    %v64 = vrot.slane %v24, %v63
    %v66 = vunpack.c.l.s4 1983009808
    %v67 = vunpack.c.0.s8 %v66
    %v68 = vlaneseq
    %v69 = vshrl.u32 %v68, 7
    %v70 = vsub.s32 %v67, %v69
    %v71 = vrot.slane %v57, %v70
    %v72 = vcombine.high %v64, %v64
    %v73 = vcombine.high %v71, %v71
    %v74 = vcombine.high %v25, %v25
    %v76 = vunpack.c.l.s4 1983009808
    %v77 = vunpack.c.0.s8 %v76
    %v78 = vlaneseq
    %v79 = vshrl.u32 %v78, 7
    %v80 = vsub.s32 %v77, %v79
    %v81 = vrot.slane %v25, %v80
    %v83 = vunpack.c.l.s4 1983009808
    %v84 = vunpack.c.0.s8 %v83
    %v85 = vlaneseq
    %v86 = vshrl.u32 %v85, 7
    %v87 = vsub.s32 %v84, %v86
    %v88 = vrot.slane %v74, %v87
    %v89 = vcombine.high %v81, %v81
    %v90 = vcombine.high %v88, %v88
    %v91 = vcombine.high %v26, %v26
    %v93 = vunpack.c.l.s4 1983009808
    %v94 = vunpack.c.0.s8 %v93
    %v95 = vlaneseq
    %v96 = vshrl.u32 %v95, 7
    %v97 = vsub.s32 %v94, %v96
    %v98 = vrot.slane %v26, %v97
    %v100 = vunpack.c.l.s4 1983009808
    %v101 = vunpack.c.0.s8 %v100
    %v102 = vlaneseq
    %v103 = vshrl.u32 %v102, 7
    %v104 = vsub.s32 %v101, %v103
    %v105 = vrot.slane %v91, %v104
    %v106 = vcombine.high %v98, %v98
    %v107 = vcombine.high %v105, %v105
    %v132 = vcombine.high %v27, %v27
    %v133 = vcombine.high %v28, %v28
    %v134 = vcombine.high %v29, %v29
    %v135 = vcombine.high %v30, %v30
    %v136 = vcombine.high %v31, %v31
    %v137 = vcombine.high %v32, %v32
    %v138 = vcombine.high %v33, %v33
    %v139 = vcombine.high %v34, %v34
    %148 = vmatprep.subr.mxu0 0.0
    %149 = vmatpush1.xpose.msra.mxu0 0.0
    %150 = vmatprep.subr.mxu0 0.0
    %151 = vmatpush1.xpose.msra.mxu0 0.0
    %152 = vmatprep.subr.mxu0 0.0
    %153 = vmatpush1.xpose.msra.mxu0 0.0
    %154 = vmatprep.subr.mxu0 0.0
    %155 = vmatpush1.xpose.msra.mxu0 0.0
    %156 = vmatprep.subr.mxu0 0.0
    %157 = vmatpush1.xpose.msra.mxu0 0.0
    %158 = vmatprep.subr.mxu0 0.0
    %159 = vmatpush1.xpose.msra.mxu0 0.0
    %160 = vmatprep.subr.mxu0 0.0
    %161 = vmatpush1.xpose.msra.mxu0 0.0
    %162 = vmatprep.subr.mxu0 0.0
    %163 = vmatpush1.xpose.msra.mxu0 0.0
    %164 = vmatprep.subr.mxu0 0.0
    %165 = vmatpush1.xpose.msra.mxu0 0.0
    %166 = vmatprep.subr.mxu0 0.0
    %167 = vmatpush1.xpose.msra.mxu0 0.0
    %168 = vmatprep.subr.mxu0 0.0
    %169 = vmatpush1.xpose.msra.mxu0 0.0
    %170 = vmatprep.subr.mxu0 0.0
    %171 = vmatpush1.xpose.msra.mxu0 0.0
    %172 = vmatprep.subr.mxu0 0.0
    %173 = vmatpush1.xpose.msra.mxu0 0.0
    %174 = vmatprep.subr.mxu0 0.0
    %175 = vmatpush1.xpose.msra.mxu0 0.0
    %176 = vmatprep.subr.mxu0 0.0
    %177 = vmatpush1.xpose.msra.mxu0 0.0
    %178 = vmatprep.subr.mxu0 %v132
    %179 = vmatpush1.xpose.msra.mxu0 %v27
    %180 = vmatprep.subr.mxu0 0.0
    %181 = vmatpush2.xpose.msra.mxu0 0.0
    %182 = vmatprep.subr.mxu0 0.0
    %183 = vmatpush2.xpose.msra.mxu0 0.0
    %184 = vmatprep.subr.mxu0 0.0
    %185 = vmatpush2.xpose.msra.mxu0 0.0
    %186 = vmatprep.subr.mxu0 0.0
    %187 = vmatpush2.xpose.msra.mxu0 0.0
    %188 = vmatprep.subr.mxu0 0.0
    %189 = vmatpush2.xpose.msra.mxu0 0.0
    %190 = vmatprep.subr.mxu0 0.0
    %191 = vmatpush2.xpose.msra.mxu0 0.0
    %192 = vmatprep.subr.mxu0 0.0
    %193 = vmatpush2.xpose.msra.mxu0 0.0
    %194 = vmatprep.subr.mxu0 0.0
    %195 = vmatpush2.xpose.msra.mxu0 0.0
    %196 = vmatprep.subr.mxu0 0.0
    %197 = vmatpush2.xpose.msra.mxu0 0.0
    %198 = vmatprep.subr.mxu0 0.0
    %199 = vmatpush2.xpose.msra.mxu0 0.0
    %200 = vmatprep.subr.mxu0 0.0
    %201 = vmatpush2.xpose.msra.mxu0 0.0
    %202 = vmatprep.subr.mxu0 0.0
    %203 = vmatpush2.xpose.msra.mxu0 0.0
    %204 = vmatprep.subr.mxu0 0.0
    %205 = vmatpush2.xpose.msra.mxu0 0.0
    %206 = vmatprep.subr.mxu0 0.0
    %207 = vmatpush2.xpose.msra.mxu0 0.0
    %208 = vmatprep.subr.mxu0 0.0
    %209 = vmatpush2.xpose.msra.mxu0 0.0
    %210 = vmatprep.subr.mxu0 0.0
    %211 = vmatpush2.xpose.msra.mxu0 0.0
    %212 = vmatprep.mubr.f32.mxu0 %v55
    %213 = vmatmul.mubr.f32.gmra.mxu0 %v47
    %v214 = vpop.f32.mrf.mxu0
    %v215 = vadd.f32 0.0, %v214
    %v216 = vpop.f32.mrf.mxu0
    %217 = vdwg.mxu0
    %218 = vmatprep.subr.mxu0 0.0
    %219 = vmatpush1.xpose.msra.mxu0 0.0
    %220 = vmatprep.subr.mxu0 0.0
    %221 = vmatpush1.xpose.msra.mxu0 0.0
    %222 = vmatprep.subr.mxu0 0.0
    %223 = vmatpush1.xpose.msra.mxu0 0.0
    %224 = vmatprep.subr.mxu0 0.0
    %225 = vmatpush1.xpose.msra.mxu0 0.0
    %226 = vmatprep.subr.mxu0 0.0
    %227 = vmatpush1.xpose.msra.mxu0 0.0
    %228 = vmatprep.subr.mxu0 0.0
    %229 = vmatpush1.xpose.msra.mxu0 0.0
    %230 = vmatprep.subr.mxu0 0.0
    %231 = vmatpush1.xpose.msra.mxu0 0.0
    %232 = vmatprep.subr.mxu0 0.0
    %233 = vmatpush1.xpose.msra.mxu0 0.0
    %234 = vmatprep.subr.mxu0 0.0
    %235 = vmatpush1.xpose.msra.mxu0 0.0
    %236 = vmatprep.subr.mxu0 0.0
    %237 = vmatpush1.xpose.msra.mxu0 0.0
    %238 = vmatprep.subr.mxu0 0.0
    %239 = vmatpush1.xpose.msra.mxu0 0.0
    %240 = vmatprep.subr.mxu0 0.0
    %241 = vmatpush1.xpose.msra.mxu0 0.0
    %242 = vmatprep.subr.mxu0 0.0
    %243 = vmatpush1.xpose.msra.mxu0 0.0
    %244 = vmatprep.subr.mxu0 0.0
    %245 = vmatpush1.xpose.msra.mxu0 0.0
    %246 = vmatprep.subr.mxu0 0.0
    %247 = vmatpush1.xpose.msra.mxu0 0.0
    %248 = vmatprep.subr.mxu0 %v133
    %249 = vmatpush1.xpose.msra.mxu0 %v28
    %250 = vmatprep.subr.mxu0 0.0
    %251 = vmatpush2.xpose.msra.mxu0 0.0
    %252 = vmatprep.subr.mxu0 0.0
    %253 = vmatpush2.xpose.msra.mxu0 0.0
    %254 = vmatprep.subr.mxu0 0.0
    %255 = vmatpush2.xpose.msra.mxu0 0.0
    %256 = vmatprep.subr.mxu0 0.0
    %257 = vmatpush2.xpose.msra.mxu0 0.0
    %258 = vmatprep.subr.mxu0 0.0
    %259 = vmatpush2.xpose.msra.mxu0 0.0
    %260 = vmatprep.subr.mxu0 0.0
    %261 = vmatpush2.xpose.msra.mxu0 0.0
    %262 = vmatprep.subr.mxu0 0.0
    %263 = vmatpush2.xpose.msra.mxu0 0.0
    %264 = vmatprep.subr.mxu0 0.0
    %265 = vmatpush2.xpose.msra.mxu0 0.0
    %266 = vmatprep.subr.mxu0 0.0
    %267 = vmatpush2.xpose.msra.mxu0 0.0
    %268 = vmatprep.subr.mxu0 0.0
    %269 = vmatpush2.xpose.msra.mxu0 0.0
    %270 = vmatprep.subr.mxu0 0.0
    %271 = vmatpush2.xpose.msra.mxu0 0.0
    %272 = vmatprep.subr.mxu0 0.0
    %273 = vmatpush2.xpose.msra.mxu0 0.0
    %274 = vmatprep.subr.mxu0 0.0
    %275 = vmatpush2.xpose.msra.mxu0 0.0
    %276 = vmatprep.subr.mxu0 0.0
    %277 = vmatpush2.xpose.msra.mxu0 0.0
    %278 = vmatprep.subr.mxu0 0.0
    %279 = vmatpush2.xpose.msra.mxu0 0.0
    %280 = vmatprep.subr.mxu0 0.0
    %281 = vmatpush2.xpose.msra.mxu0 0.0
    %282 = vmatprep.mubr.f32.mxu0 %v56
    %283 = vmatmul.mubr.f32.gmra.mxu0 %v54
    %v284 = vpop.f32.mrf.mxu0
    %v285 = vadd.f32 %v215, %v284
    %v286 = vpop.f32.mrf.mxu0
    %287 = vdwg.mxu0
    %288 = vmatprep.subr.mxu0 0.0
    %289 = vmatpush1.xpose.msra.mxu0 0.0
    %290 = vmatprep.subr.mxu0 0.0
    %291 = vmatpush1.xpose.msra.mxu0 0.0
    %292 = vmatprep.subr.mxu0 0.0
    %293 = vmatpush1.xpose.msra.mxu0 0.0
    %294 = vmatprep.subr.mxu0 0.0
    %295 = vmatpush1.xpose.msra.mxu0 0.0
    %296 = vmatprep.subr.mxu0 0.0
    %297 = vmatpush1.xpose.msra.mxu0 0.0
    %298 = vmatprep.subr.mxu0 0.0
    %299 = vmatpush1.xpose.msra.mxu0 0.0
    %300 = vmatprep.subr.mxu0 0.0
    %301 = vmatpush1.xpose.msra.mxu0 0.0
    %302 = vmatprep.subr.mxu0 0.0
    %303 = vmatpush1.xpose.msra.mxu0 0.0
    %304 = vmatprep.subr.mxu0 0.0
    %305 = vmatpush1.xpose.msra.mxu0 0.0
    %306 = vmatprep.subr.mxu0 0.0
    %307 = vmatpush1.xpose.msra.mxu0 0.0
    %308 = vmatprep.subr.mxu0 0.0
    %309 = vmatpush1.xpose.msra.mxu0 0.0
    %310 = vmatprep.subr.mxu0 0.0
    %311 = vmatpush1.xpose.msra.mxu0 0.0
    %312 = vmatprep.subr.mxu0 0.0
    %313 = vmatpush1.xpose.msra.mxu0 0.0
    %314 = vmatprep.subr.mxu0 0.0
    %315 = vmatpush1.xpose.msra.mxu0 0.0
    %316 = vmatprep.subr.mxu0 0.0
    %317 = vmatpush1.xpose.msra.mxu0 0.0
    %318 = vmatprep.subr.mxu0 %v134
    %319 = vmatpush1.xpose.msra.mxu0 %v29
    %320 = vmatprep.subr.mxu0 0.0
    %321 = vmatpush2.xpose.msra.mxu0 0.0
    %322 = vmatprep.subr.mxu0 0.0
    %323 = vmatpush2.xpose.msra.mxu0 0.0
    %324 = vmatprep.subr.mxu0 0.0
    %325 = vmatpush2.xpose.msra.mxu0 0.0
    %326 = vmatprep.subr.mxu0 0.0
    %327 = vmatpush2.xpose.msra.mxu0 0.0
    %328 = vmatprep.subr.mxu0 0.0
    %329 = vmatpush2.xpose.msra.mxu0 0.0
    %330 = vmatprep.subr.mxu0 0.0
    %331 = vmatpush2.xpose.msra.mxu0 0.0
    %332 = vmatprep.subr.mxu0 0.0
    %333 = vmatpush2.xpose.msra.mxu0 0.0
    %334 = vmatprep.subr.mxu0 0.0
    %335 = vmatpush2.xpose.msra.mxu0 0.0
    %336 = vmatprep.subr.mxu0 0.0
    %337 = vmatpush2.xpose.msra.mxu0 0.0
    %338 = vmatprep.subr.mxu0 0.0
    %339 = vmatpush2.xpose.msra.mxu0 0.0
    %340 = vmatprep.subr.mxu0 0.0
    %341 = vmatpush2.xpose.msra.mxu0 0.0
    %342 = vmatprep.subr.mxu0 0.0
    %343 = vmatpush2.xpose.msra.mxu0 0.0
    %344 = vmatprep.subr.mxu0 0.0
    %345 = vmatpush2.xpose.msra.mxu0 0.0
    %346 = vmatprep.subr.mxu0 0.0
    %347 = vmatpush2.xpose.msra.mxu0 0.0
    %348 = vmatprep.subr.mxu0 0.0
    %349 = vmatpush2.xpose.msra.mxu0 0.0
    %350 = vmatprep.subr.mxu0 0.0
    %351 = vmatpush2.xpose.msra.mxu0 0.0
    %352 = vmatprep.mubr.f32.mxu0 %v72
    %353 = vmatmul.mubr.f32.gmra.mxu0 %v64
    %v354 = vpop.f32.mrf.mxu0
    %v355 = vadd.f32 %v285, %v354
    %v356 = vpop.f32.mrf.mxu0
    %357 = vdwg.mxu0
    %358 = vmatprep.subr.mxu0 0.0
    %359 = vmatpush1.xpose.msra.mxu0 0.0
    %360 = vmatprep.subr.mxu0 0.0
    %361 = vmatpush1.xpose.msra.mxu0 0.0
    %362 = vmatprep.subr.mxu0 0.0
    %363 = vmatpush1.xpose.msra.mxu0 0.0
    %364 = vmatprep.subr.mxu0 0.0
    %365 = vmatpush1.xpose.msra.mxu0 0.0
    %366 = vmatprep.subr.mxu0 0.0
    %367 = vmatpush1.xpose.msra.mxu0 0.0
    %368 = vmatprep.subr.mxu0 0.0
    %369 = vmatpush1.xpose.msra.mxu0 0.0
    %370 = vmatprep.subr.mxu0 0.0
    %371 = vmatpush1.xpose.msra.mxu0 0.0
    %372 = vmatprep.subr.mxu0 0.0
    %373 = vmatpush1.xpose.msra.mxu0 0.0
    %374 = vmatprep.subr.mxu0 0.0
    %375 = vmatpush1.xpose.msra.mxu0 0.0
    %376 = vmatprep.subr.mxu0 0.0
    %377 = vmatpush1.xpose.msra.mxu0 0.0
    %378 = vmatprep.subr.mxu0 0.0
    %379 = vmatpush1.xpose.msra.mxu0 0.0
    %380 = vmatprep.subr.mxu0 0.0
    %381 = vmatpush1.xpose.msra.mxu0 0.0
    %382 = vmatprep.subr.mxu0 0.0
    %383 = vmatpush1.xpose.msra.mxu0 0.0
    %384 = vmatprep.subr.mxu0 0.0
    %385 = vmatpush1.xpose.msra.mxu0 0.0
    %386 = vmatprep.subr.mxu0 0.0
    %387 = vmatpush1.xpose.msra.mxu0 0.0
    %388 = vmatprep.subr.mxu0 %v135
    %389 = vmatpush1.xpose.msra.mxu0 %v30
    %390 = vmatprep.subr.mxu0 0.0
    %391 = vmatpush2.xpose.msra.mxu0 0.0
    %392 = vmatprep.subr.mxu0 0.0
    %393 = vmatpush2.xpose.msra.mxu0 0.0
    %394 = vmatprep.subr.mxu0 0.0
    %395 = vmatpush2.xpose.msra.mxu0 0.0
    %396 = vmatprep.subr.mxu0 0.0
    %397 = vmatpush2.xpose.msra.mxu0 0.0
    %398 = vmatprep.subr.mxu0 0.0
    %399 = vmatpush2.xpose.msra.mxu0 0.0
    %400 = vmatprep.subr.mxu0 0.0
    %401 = vmatpush2.xpose.msra.mxu0 0.0
    %402 = vmatprep.subr.mxu0 0.0
    %403 = vmatpush2.xpose.msra.mxu0 0.0
    %404 = vmatprep.subr.mxu0 0.0
    %405 = vmatpush2.xpose.msra.mxu0 0.0
    %406 = vmatprep.subr.mxu0 0.0
    %407 = vmatpush2.xpose.msra.mxu0 0.0
    %408 = vmatprep.subr.mxu0 0.0
    %409 = vmatpush2.xpose.msra.mxu0 0.0
    %410 = vmatprep.subr.mxu0 0.0
    %411 = vmatpush2.xpose.msra.mxu0 0.0
    %412 = vmatprep.subr.mxu0 0.0
    %413 = vmatpush2.xpose.msra.mxu0 0.0
    %414 = vmatprep.subr.mxu0 0.0
    %415 = vmatpush2.xpose.msra.mxu0 0.0
    %416 = vmatprep.subr.mxu0 0.0
    %417 = vmatpush2.xpose.msra.mxu0 0.0
    %418 = vmatprep.subr.mxu0 0.0
    %419 = vmatpush2.xpose.msra.mxu0 0.0
    %420 = vmatprep.subr.mxu0 0.0
    %421 = vmatpush2.xpose.msra.mxu0 0.0
    %422 = vmatprep.mubr.f32.mxu0 %v73
    %423 = vmatmul.mubr.f32.gmra.mxu0 %v71
    %v424 = vpop.f32.mrf.mxu0
    %v425 = vadd.f32 %v355, %v424
    %v426 = vpop.f32.mrf.mxu0
    %427 = vdwg.mxu0
    %428 = vmatprep.subr.mxu0 0.0
    %429 = vmatpush1.xpose.msra.mxu0 0.0
    %430 = vmatprep.subr.mxu0 0.0
    %431 = vmatpush1.xpose.msra.mxu0 0.0
    %432 = vmatprep.subr.mxu0 0.0
    %433 = vmatpush1.xpose.msra.mxu0 0.0
    %434 = vmatprep.subr.mxu0 0.0
    %435 = vmatpush1.xpose.msra.mxu0 0.0
    %436 = vmatprep.subr.mxu0 0.0
    %437 = vmatpush1.xpose.msra.mxu0 0.0
    %438 = vmatprep.subr.mxu0 0.0
    %439 = vmatpush1.xpose.msra.mxu0 0.0
    %440 = vmatprep.subr.mxu0 0.0
    %441 = vmatpush1.xpose.msra.mxu0 0.0
    %442 = vmatprep.subr.mxu0 0.0
    %443 = vmatpush1.xpose.msra.mxu0 0.0
    %444 = vmatprep.subr.mxu0 0.0
    %445 = vmatpush1.xpose.msra.mxu0 0.0
    %446 = vmatprep.subr.mxu0 0.0
    %447 = vmatpush1.xpose.msra.mxu0 0.0
    %448 = vmatprep.subr.mxu0 0.0
    %449 = vmatpush1.xpose.msra.mxu0 0.0
    %450 = vmatprep.subr.mxu0 0.0
    %451 = vmatpush1.xpose.msra.mxu0 0.0
    %452 = vmatprep.subr.mxu0 0.0
    %453 = vmatpush1.xpose.msra.mxu0 0.0
    %454 = vmatprep.subr.mxu0 0.0
    %455 = vmatpush1.xpose.msra.mxu0 0.0
    %456 = vmatprep.subr.mxu0 0.0
    %457 = vmatpush1.xpose.msra.mxu0 0.0
    %458 = vmatprep.subr.mxu0 %v136
    %459 = vmatpush1.xpose.msra.mxu0 %v31
    %460 = vmatprep.subr.mxu0 0.0
    %461 = vmatpush2.xpose.msra.mxu0 0.0
    %462 = vmatprep.subr.mxu0 0.0
    %463 = vmatpush2.xpose.msra.mxu0 0.0
    %464 = vmatprep.subr.mxu0 0.0
    %465 = vmatpush2.xpose.msra.mxu0 0.0
    %466 = vmatprep.subr.mxu0 0.0
    %467 = vmatpush2.xpose.msra.mxu0 0.0
    %468 = vmatprep.subr.mxu0 0.0
    %469 = vmatpush2.xpose.msra.mxu0 0.0
    %470 = vmatprep.subr.mxu0 0.0
    %471 = vmatpush2.xpose.msra.mxu0 0.0
    %472 = vmatprep.subr.mxu0 0.0
    %473 = vmatpush2.xpose.msra.mxu0 0.0
    %474 = vmatprep.subr.mxu0 0.0
    %475 = vmatpush2.xpose.msra.mxu0 0.0
    %476 = vmatprep.subr.mxu0 0.0
    %477 = vmatpush2.xpose.msra.mxu0 0.0
    %478 = vmatprep.subr.mxu0 0.0
    %479 = vmatpush2.xpose.msra.mxu0 0.0
    %480 = vmatprep.subr.mxu0 0.0
    %481 = vmatpush2.xpose.msra.mxu0 0.0
    %482 = vmatprep.subr.mxu0 0.0
    %483 = vmatpush2.xpose.msra.mxu0 0.0
    %484 = vmatprep.subr.mxu0 0.0
    %485 = vmatpush2.xpose.msra.mxu0 0.0
    %486 = vmatprep.subr.mxu0 0.0
    %487 = vmatpush2.xpose.msra.mxu0 0.0
    %488 = vmatprep.subr.mxu0 0.0
    %489 = vmatpush2.xpose.msra.mxu0 0.0
    %490 = vmatprep.subr.mxu0 0.0
    %491 = vmatpush2.xpose.msra.mxu0 0.0
    %492 = vmatprep.mubr.f32.mxu0 %v89
    %493 = vmatmul.mubr.f32.gmra.mxu0 %v81
    %v494 = vpop.f32.mrf.mxu0
    %v495 = vadd.f32 %v425, %v494
    %v496 = vpop.f32.mrf.mxu0
    %497 = vdwg.mxu0
    %498 = vmatprep.subr.mxu0 0.0
    %499 = vmatpush1.xpose.msra.mxu0 0.0
    %500 = vmatprep.subr.mxu0 0.0
    %501 = vmatpush1.xpose.msra.mxu0 0.0
    %502 = vmatprep.subr.mxu0 0.0
    %503 = vmatpush1.xpose.msra.mxu0 0.0
    %504 = vmatprep.subr.mxu0 0.0
    %505 = vmatpush1.xpose.msra.mxu0 0.0
    %506 = vmatprep.subr.mxu0 0.0
    %507 = vmatpush1.xpose.msra.mxu0 0.0
    %508 = vmatprep.subr.mxu0 0.0
    %509 = vmatpush1.xpose.msra.mxu0 0.0
    %510 = vmatprep.subr.mxu0 0.0
    %511 = vmatpush1.xpose.msra.mxu0 0.0
    %512 = vmatprep.subr.mxu0 0.0
    %513 = vmatpush1.xpose.msra.mxu0 0.0
    %514 = vmatprep.subr.mxu0 0.0
    %515 = vmatpush1.xpose.msra.mxu0 0.0
    %516 = vmatprep.subr.mxu0 0.0
    %517 = vmatpush1.xpose.msra.mxu0 0.0
    %518 = vmatprep.subr.mxu0 0.0
    %519 = vmatpush1.xpose.msra.mxu0 0.0
    %520 = vmatprep.subr.mxu0 0.0
    %521 = vmatpush1.xpose.msra.mxu0 0.0
    %522 = vmatprep.subr.mxu0 0.0
    %523 = vmatpush1.xpose.msra.mxu0 0.0
    %524 = vmatprep.subr.mxu0 0.0
    %525 = vmatpush1.xpose.msra.mxu0 0.0
    %526 = vmatprep.subr.mxu0 0.0
    %527 = vmatpush1.xpose.msra.mxu0 0.0
    %528 = vmatprep.subr.mxu0 %v137
    %529 = vmatpush1.xpose.msra.mxu0 %v32
    %530 = vmatprep.subr.mxu0 0.0
    %531 = vmatpush2.xpose.msra.mxu0 0.0
    %532 = vmatprep.subr.mxu0 0.0
    %533 = vmatpush2.xpose.msra.mxu0 0.0
    %534 = vmatprep.subr.mxu0 0.0
    %535 = vmatpush2.xpose.msra.mxu0 0.0
    %536 = vmatprep.subr.mxu0 0.0
    %537 = vmatpush2.xpose.msra.mxu0 0.0
    %538 = vmatprep.subr.mxu0 0.0
    %539 = vmatpush2.xpose.msra.mxu0 0.0
    %540 = vmatprep.subr.mxu0 0.0
    %541 = vmatpush2.xpose.msra.mxu0 0.0
    %542 = vmatprep.subr.mxu0 0.0
    %543 = vmatpush2.xpose.msra.mxu0 0.0
    %544 = vmatprep.subr.mxu0 0.0
    %545 = vmatpush2.xpose.msra.mxu0 0.0
    %546 = vmatprep.subr.mxu0 0.0
    %547 = vmatpush2.xpose.msra.mxu0 0.0
    %548 = vmatprep.subr.mxu0 0.0
    %549 = vmatpush2.xpose.msra.mxu0 0.0
    %550 = vmatprep.subr.mxu0 0.0
    %551 = vmatpush2.xpose.msra.mxu0 0.0
    %552 = vmatprep.subr.mxu0 0.0
    %553 = vmatpush2.xpose.msra.mxu0 0.0
    %554 = vmatprep.subr.mxu0 0.0
    %555 = vmatpush2.xpose.msra.mxu0 0.0
    %556 = vmatprep.subr.mxu0 0.0
    %557 = vmatpush2.xpose.msra.mxu0 0.0
    %558 = vmatprep.subr.mxu0 0.0
    %559 = vmatpush2.xpose.msra.mxu0 0.0
    %560 = vmatprep.subr.mxu0 0.0
    %561 = vmatpush2.xpose.msra.mxu0 0.0
    %562 = vmatprep.mubr.f32.mxu0 %v90
    %563 = vmatmul.mubr.f32.gmra.mxu0 %v88
    %v564 = vpop.f32.mrf.mxu0
    %v565 = vadd.f32 %v495, %v564
    %v566 = vpop.f32.mrf.mxu0
    %567 = vdwg.mxu0
    %568 = vmatprep.subr.mxu0 0.0
    %569 = vmatpush1.xpose.msra.mxu0 0.0
    %570 = vmatprep.subr.mxu0 0.0
    %571 = vmatpush1.xpose.msra.mxu0 0.0
    %572 = vmatprep.subr.mxu0 0.0
    %573 = vmatpush1.xpose.msra.mxu0 0.0
    %574 = vmatprep.subr.mxu0 0.0
    %575 = vmatpush1.xpose.msra.mxu0 0.0
    %576 = vmatprep.subr.mxu0 0.0
    %577 = vmatpush1.xpose.msra.mxu0 0.0
    %578 = vmatprep.subr.mxu0 0.0
    %579 = vmatpush1.xpose.msra.mxu0 0.0
    %580 = vmatprep.subr.mxu0 0.0
    %581 = vmatpush1.xpose.msra.mxu0 0.0
    %582 = vmatprep.subr.mxu0 0.0
    %583 = vmatpush1.xpose.msra.mxu0 0.0
    %584 = vmatprep.subr.mxu0 0.0
    %585 = vmatpush1.xpose.msra.mxu0 0.0
    %586 = vmatprep.subr.mxu0 0.0
    %587 = vmatpush1.xpose.msra.mxu0 0.0
    %588 = vmatprep.subr.mxu0 0.0
    %589 = vmatpush1.xpose.msra.mxu0 0.0
    %590 = vmatprep.subr.mxu0 0.0
    %591 = vmatpush1.xpose.msra.mxu0 0.0
    %592 = vmatprep.subr.mxu0 0.0
    %593 = vmatpush1.xpose.msra.mxu0 0.0
    %594 = vmatprep.subr.mxu0 0.0
    %595 = vmatpush1.xpose.msra.mxu0 0.0
    %596 = vmatprep.subr.mxu0 0.0
    %597 = vmatpush1.xpose.msra.mxu0 0.0
    %598 = vmatprep.subr.mxu0 %v138
    %599 = vmatpush1.xpose.msra.mxu0 %v33
    %600 = vmatprep.subr.mxu0 0.0
    %601 = vmatpush2.xpose.msra.mxu0 0.0
    %602 = vmatprep.subr.mxu0 0.0
    %603 = vmatpush2.xpose.msra.mxu0 0.0
    %604 = vmatprep.subr.mxu0 0.0
    %605 = vmatpush2.xpose.msra.mxu0 0.0
    %606 = vmatprep.subr.mxu0 0.0
    %607 = vmatpush2.xpose.msra.mxu0 0.0
    %608 = vmatprep.subr.mxu0 0.0
    %609 = vmatpush2.xpose.msra.mxu0 0.0
    %610 = vmatprep.subr.mxu0 0.0
    %611 = vmatpush2.xpose.msra.mxu0 0.0
    %612 = vmatprep.subr.mxu0 0.0
    %613 = vmatpush2.xpose.msra.mxu0 0.0
    %614 = vmatprep.subr.mxu0 0.0
    %615 = vmatpush2.xpose.msra.mxu0 0.0
    %616 = vmatprep.subr.mxu0 0.0
    %617 = vmatpush2.xpose.msra.mxu0 0.0
    %618 = vmatprep.subr.mxu0 0.0
    %619 = vmatpush2.xpose.msra.mxu0 0.0
    %620 = vmatprep.subr.mxu0 0.0
    %621 = vmatpush2.xpose.msra.mxu0 0.0
    %622 = vmatprep.subr.mxu0 0.0
    %623 = vmatpush2.xpose.msra.mxu0 0.0
    %624 = vmatprep.subr.mxu0 0.0
    %625 = vmatpush2.xpose.msra.mxu0 0.0
    %626 = vmatprep.subr.mxu0 0.0
    %627 = vmatpush2.xpose.msra.mxu0 0.0
    %628 = vmatprep.subr.mxu0 0.0
    %629 = vmatpush2.xpose.msra.mxu0 0.0
    %630 = vmatprep.subr.mxu0 0.0
    %631 = vmatpush2.xpose.msra.mxu0 0.0
    %632 = vmatprep.mubr.f32.mxu0 %v106
    %633 = vmatmul.mubr.f32.gmra.mxu0 %v98
    %v634 = vpop.f32.mrf.mxu0
    %v635 = vadd.f32 %v565, %v634
    %v636 = vpop.f32.mrf.mxu0
    %637 = vdwg.mxu0
    %638 = vmatprep.subr.mxu0 0.0
    %639 = vmatpush1.xpose.msra.mxu0 0.0
    %640 = vmatprep.subr.mxu0 0.0
    %641 = vmatpush1.xpose.msra.mxu0 0.0
    %642 = vmatprep.subr.mxu0 0.0
    %643 = vmatpush1.xpose.msra.mxu0 0.0
    %644 = vmatprep.subr.mxu0 0.0
    %645 = vmatpush1.xpose.msra.mxu0 0.0
    %646 = vmatprep.subr.mxu0 0.0
    %647 = vmatpush1.xpose.msra.mxu0 0.0
    %648 = vmatprep.subr.mxu0 0.0
    %649 = vmatpush1.xpose.msra.mxu0 0.0
    %650 = vmatprep.subr.mxu0 0.0
    %651 = vmatpush1.xpose.msra.mxu0 0.0
    %652 = vmatprep.subr.mxu0 0.0
    %653 = vmatpush1.xpose.msra.mxu0 0.0
    %654 = vmatprep.subr.mxu0 0.0
    %655 = vmatpush1.xpose.msra.mxu0 0.0
    %656 = vmatprep.subr.mxu0 0.0
    %657 = vmatpush1.xpose.msra.mxu0 0.0
    %658 = vmatprep.subr.mxu0 0.0
    %659 = vmatpush1.xpose.msra.mxu0 0.0
    %660 = vmatprep.subr.mxu0 0.0
    %661 = vmatpush1.xpose.msra.mxu0 0.0
    %662 = vmatprep.subr.mxu0 0.0
    %663 = vmatpush1.xpose.msra.mxu0 0.0
    %664 = vmatprep.subr.mxu0 0.0
    %665 = vmatpush1.xpose.msra.mxu0 0.0
    %666 = vmatprep.subr.mxu0 0.0
    %667 = vmatpush1.xpose.msra.mxu0 0.0
    %668 = vmatprep.subr.mxu0 %v139
    %669 = vmatpush1.xpose.msra.mxu0 %v34
    %670 = vmatprep.subr.mxu0 0.0
    %671 = vmatpush2.xpose.msra.mxu0 0.0
    %672 = vmatprep.subr.mxu0 0.0
    %673 = vmatpush2.xpose.msra.mxu0 0.0
    %674 = vmatprep.subr.mxu0 0.0
    %675 = vmatpush2.xpose.msra.mxu0 0.0
    %676 = vmatprep.subr.mxu0 0.0
    %677 = vmatpush2.xpose.msra.mxu0 0.0
    %678 = vmatprep.subr.mxu0 0.0
    %679 = vmatpush2.xpose.msra.mxu0 0.0
    %680 = vmatprep.subr.mxu0 0.0
    %681 = vmatpush2.xpose.msra.mxu0 0.0
    %682 = vmatprep.subr.mxu0 0.0
    %683 = vmatpush2.xpose.msra.mxu0 0.0
    %684 = vmatprep.subr.mxu0 0.0
    %685 = vmatpush2.xpose.msra.mxu0 0.0
    %686 = vmatprep.subr.mxu0 0.0
    %687 = vmatpush2.xpose.msra.mxu0 0.0
    %688 = vmatprep.subr.mxu0 0.0
    %689 = vmatpush2.xpose.msra.mxu0 0.0
    %690 = vmatprep.subr.mxu0 0.0
    %691 = vmatpush2.xpose.msra.mxu0 0.0
    %692 = vmatprep.subr.mxu0 0.0
    %693 = vmatpush2.xpose.msra.mxu0 0.0
    %694 = vmatprep.subr.mxu0 0.0
    %695 = vmatpush2.xpose.msra.mxu0 0.0
    %696 = vmatprep.subr.mxu0 0.0
    %697 = vmatpush2.xpose.msra.mxu0 0.0
    %698 = vmatprep.subr.mxu0 0.0
    %699 = vmatpush2.xpose.msra.mxu0 0.0
    %700 = vmatprep.subr.mxu0 0.0
    %701 = vmatpush2.xpose.msra.mxu0 0.0
    %702 = vmatprep.mubr.f32.mxu0 %v107
    %703 = vmatmul.mubr.f32.gmra.mxu0 %v105
    %v704 = vpop.f32.mrf.mxu0
    %v705 = vadd.f32 %v635, %v704
    %v706 = vpop.f32.mrf.mxu0
    %707 = vdwg.mxu0
    %v708 = vadd.f32 %v35, %v705
    %vm709 = vcmask 25600
    %710 = vst.msk [vmem:[#allocation2] sm:$0x3] %vm709, %v708
    // Predicated region
    $region18: #{_lambda_.7} parent=1 // pred_check
      %p711 = pneg %p15
    $region19: #{_lambda_.7} parent=1 // pred_check_branch
      %713 = sbr.rel (%p711) target = $region21
    $region20: #{_lambda_.7} parent=1 // pred_region
      %v714 = vld [vmem:[#allocation2] sm:$0x3]
      %v715 = vld [vmem:[%s2] sm:$0x1]
      %v717 = vlaneseq
      %v718 = vshrl.u32 %v717, 7
      %v719 = vsub.s32 0, %v718
      %v720 = vrot.slane %v715, %v719
      %v722 = vadd.f32 %v714, %v720
      %723 = vst.msk [vmem:[#allocation3] sm:$0x3] %vm709, %v722
    $region21: #{_lambda_.7} parent=1 // pred_fallthru
      _
    // Predicated region
    $region22: #{_lambda_.7} parent=1 // pred_check
      _
    $region23: #{_lambda_.7} parent=1 // pred_check_branch
      %725 = sbr.rel (0) target = $region25
    $region24: #{_lambda_.7} parent=1 // pred_region
      %s727 = ssub.s32 32, 32
      %728 = vsyncadd [#allocation4], %s727
      %s730 = sshll.u32 [#allocation3], 4
      %s731 = int_to_ptr.vmem [resolvable:$true] %s730
      %733 = dma.vmem_to_hbm [thread:$0]  %s731, 32, %s3, [#allocation4]
    $region25: #{_lambda_.7} parent=1 // pred_fallthru
      _
    // Predicated region
    $region26: #{_lambda_.7} parent=1 // pred_check
      _
    $region27: #{_lambda_.7} parent=1 // pred_check_branch
      %735 = sbr.rel (0) target = $region29
    $region28: #{_lambda_.7} parent=1 // pred_region
      %736 = dma.done [#allocation4], 32
    $region29: #{_lambda_.7} parent=1 // pred_fallthru
      _
    %737 = vsyncpa [#allocation4], 1

</llo_original>
